<compile_context>
chip_gen: v7x
topology: tpu7x:2x2x1
jax: 0.10.0
libtpu: 0.0.40
codegen_flags: <defaults>
</compile_context>

<pallas_src>
import functools

import jax
import jax.numpy as jnp
from jax.experimental import pallas as pl
from jax.experimental.pallas import tpu as pltpu

_LANE = 128


def _round_up(x, m):
    return (x + m - 1) // m * m


# ----------------------------------------------------------------------------
# Fused kernel: grid = (phase, node row block)
#   phases 0 .. k-2        : ChebConv-1 recursion steps t = 1..k-1
#   phases k-1 .. 2k-3     : ChebConv-2 recursion steps t = 1..k-1
#   phase k-2  (last of L1): also does concat@W1 + b1 + ReLU -> H (layer-2 T_0)
#   phase 2k-3 (last of L2): also does concat@W2 + b2 + ReLU + MLP -> output
# ----------------------------------------------------------------------------
def _chebnet_fused_kernel(a_ref, x_ref, w1_ref, b1_ref, w2_ref, b2_ref,
                          mw1_ref, mb1_ref, mw2_ref, mb2_ref,
                          o_ref, xcat_ref, c32_ref, *, k, tm, n_pad):
    """One fused Chebnet forward.

    a_ref    : (tm, n_pad)        bf16 adjacency row block (streamed per step)
    x_ref    : (n_pad, fp)        bf16 node features (resident)
    w1/w2    : (k*fp, fp)         bf16 ChebConv weights, (-1)^t sign folded in
    b1/b2    : (1, fp)            f32  ChebConv biases
    mw1/mw2  : (fp, fp)/(fp, op)  bf16 MLP weights;  mb1/mb2 f32 biases
    o_ref    : (n_pad, op)        f32  output (resident, written on last phase)
    xcat_ref : (k*n_pad, fp)      bf16 scratch: term-major [T_0; ...; T_{k-1}]
    c32_ref  : (2*n_pad, fp)      f32  scratch: rolling T_{t-2}/T_{t-1} carries
    """
    p = pl.program_id(0)                     # Chebyshev phase
    i = pl.program_id(1)                     # node row block
    km1 = k - 1
    row0 = pl.multiple_of(i * tm, tm)

    def term_rows(term, size=tm, base=0):
        # Rows [term * n_pad + base, +size) of a term-major flattened scratch.
        return pl.ds(pl.multiple_of(term * n_pad + base, tm), size)

    a_blk = a_ref[...]                       # (tm, n_pad) bf16

    # Step index within the current ChebConv layer (1 .. k-1).
    t = jnp.where(p >= km1, p - km1, p) + 1

    # ---- phase 0: seed T_0 = X for this row block, compute T_1 = A @ X. -----
    @pl.when(p == 0)
    def _():
        x0_blk = x_ref[pl.ds(row0, tm), :]                       # (tm, fp) bf16
        xcat_ref[term_rows(0, base=row0), :] = x0_blk
        x1 = jnp.dot(a_blk, x_ref[...], preferred_element_type=jnp.float32)
        xcat_ref[term_rows(1, base=row0), :] = x1.astype(jnp.bfloat16)
        if k >= 3:
            c32_ref[term_rows(0, base=row0), :] = x0_blk.astype(jnp.float32)
            c32_ref[term_rows(1, base=row0), :] = x1

    # ---- phases >= 1: T_t = 2 A T_{t-1} - T_{t-2}
    #      (first step of layer 2, p == k-1, is just T_1 = A @ H). -------------
    @pl.when(p != 0)
    def _():
        prev = xcat_ref[term_rows(t - 1, size=n_pad), :]         # bf16 MXU feed
        ax = jnp.dot(a_blk, prev, preferred_element_type=jnp.float32)
        if k >= 3:
            x_prev = c32_ref[term_rows(t % 2, base=row0), :]     # f32 T_{t-2}
            xt = jnp.where(p == km1, ax, 2.0 * ax - x_prev)
            c32_ref[term_rows(t % 2, base=row0), :] = xt
        else:
            xt = ax
        xcat_ref[term_rows(t, base=row0), :] = xt.astype(jnp.bfloat16)

    def contract(w_ref, b_ref):
        xc = jnp.concatenate(
            [xcat_ref[term_rows(tt, base=row0), :] for tt in range(k)], axis=-1)
        acc = jnp.dot(xc, w_ref[...], preferred_element_type=jnp.float32)
        return jnp.maximum(acc + b_ref[...], 0.0)

    # ---- last layer-1 phase: H = relu(concat_t T_t @ W1 + b1) -> layer-2 T_0.
    @pl.when(p == k - 2)
    def _():
        h = contract(w1_ref, b1_ref)
        xcat_ref[term_rows(0, base=row0), :] = h.astype(jnp.bfloat16)
        if k >= 3:
            c32_ref[term_rows(0, base=row0), :] = h

    # ---- last phase: layer-2 contraction + MLP head; write this block's rows.
    @pl.when(p == 2 * k - 3)
    def _():
        g = contract(w2_ref, b2_ref).astype(jnp.bfloat16)
        m = jnp.maximum(
            jnp.dot(g, mw1_ref[...], preferred_element_type=jnp.float32)
            + mb1_ref[...], 0.0).astype(jnp.bfloat16)
        o_ref[pl.ds(row0, tm), :] = (
            jnp.dot(m, mw2_ref[...], preferred_element_type=jnp.float32)
            + mb2_ref[...])


# ----------------------------------------------------------------------------
# Host-side wrapper (padding, sign folding, dtype casts, VMEM budgeting)
# ----------------------------------------------------------------------------
def _pad2(m, rows, cols):
    r, c = m.shape
    return jnp.pad(m, ((0, rows - r), (0, cols - c)))


def _pad_cheb_weight(w, k, f_in, f_pad, h, h_pad):
    """(k*f_in, h) -> (k*f_pad, h_pad) bf16, folding the (-1)^t Chebyshev sign."""
    w = w.reshape(k, f_in, h)
    signs = jnp.where(jnp.arange(k) % 2 == 0, 1.0, -1.0).astype(w.dtype)
    w = w * signs[:, None, None]
    w = jnp.pad(w, ((0, 0), (0, f_pad - f_in), (0, h_pad - h)))
    return w.reshape(k * f_pad, h_pad).astype(jnp.bfloat16)


def _derive_vmem_limit(n_pad, tm, fp, k, out_pad):
    """VMEM budget derived from the padded working set, capped per generation."""
    need = (
        2 * tm * n_pad * 2                                  # 2x A row blocks (bf16)
        + 2 * n_pad * fp * 2                                # resident X (bf16)
        + 2 * (2 * k * fp * fp + fp * fp + fp * out_pad) * 2  # weights (bf16)
        + 2 * (3 * fp + out_pad) * 4                        # biases (f32)
        + n_pad * out_pad * 4                               # resident output (f32)
        + k * n_pad * fp * 2                                # term scratch (bf16)
        + 2 * n_pad * fp * 4                                # f32 recursion carries
    )
    try:
        kind = jax.devices()[0].device_kind.lower()
    except Exception:
        kind = ""
    if "v7" in kind or "7x" in kind:
        cap = 56 * (1 << 20)      # v7x: 64 MiB physical per TensorCore
    elif any(v in kind for v in ("v4", "v5", "v6")):
        cap = 100 * (1 << 20)     # 128 MiB physical
    else:
        cap = 48 * (1 << 20)      # unknown generation: stay conservative
    return int(min(cap, max(int(need * 1.25) + (4 << 20), 16 << 20)))


def chebnet_forward(a_norm, features, params, *, k):
    if k < 2:
        raise ValueError("chebnet_forward requires k >= 2 (see TODO above)")

    n, f = features.shape
    h = params["cheb1_w"].shape[1]
    out = params["mlp_w2"].shape[1]

    f_pad = _round_up(max(f, h), _LANE)      # shared lane width (feat / hidden)
    out_pad = _round_up(out, _LANE)
    n_pad = _round_up(n, _LANE)
    tm = 128 if n_pad <= 256 else 256        # node row-block size
    n_pad = _round_up(n_pad, tm)
    n_blk = n_pad // tm
    n_phase = 2 * (k - 1)                    # A @ T_t passes: (k-1) per ChebConv

    a_p = _pad2(a_norm, n_pad, n_pad).astype(jnp.bfloat16)
    x_p = _pad2(features, n_pad, f_pad).astype(jnp.bfloat16)

    w1 = _pad_cheb_weight(params["cheb1_w"], k, f, f_pad, h, f_pad)
    b1 = _pad2(params["cheb1_b"].reshape(1, h).astype(jnp.float32), 1, f_pad)
    w2 = _pad_cheb_weight(params["cheb2_w"], k, h, f_pad, h, f_pad)
    b2 = _pad2(params["cheb2_b"].reshape(1, h).astype(jnp.float32), 1, f_pad)
    mw1 = _pad2(params["mlp_w1"], f_pad, f_pad).astype(jnp.bfloat16)
    mb1 = _pad2(params["mlp_b1"].reshape(1, h).astype(jnp.float32), 1, f_pad)
    mw2 = _pad2(params["mlp_w2"], f_pad, out_pad).astype(jnp.bfloat16)
    mb2 = _pad2(params["mlp_b2"].reshape(1, out).astype(jnp.float32), 1, out_pad)

    def full(shape):
        # Constant-index full block: fetched once, resident for the whole grid.
        return pl.BlockSpec(shape, lambda p, i: (0,) * len(shape))

    kernel = functools.partial(_chebnet_fused_kernel, k=k, tm=tm, n_pad=n_pad)
    out_p = pl.pallas_call(
        kernel,
        out_shape=jax.ShapeDtypeStruct((n_pad, out_pad), jnp.float32),
        grid=(n_phase, n_blk),
        in_specs=[
            pl.BlockSpec((tm, n_pad), lambda p, i: (i, 0)),  # streamed A blocks
            full((n_pad, f_pad)),                            # X (resident)
            full((k * f_pad, f_pad)), full((1, f_pad)),      # ChebConv-1 W / b
            full((k * f_pad, f_pad)), full((1, f_pad)),      # ChebConv-2 W / b
            full((f_pad, f_pad)), full((1, f_pad)),          # MLP W1 / b1
            full((f_pad, out_pad)), full((1, out_pad)),      # MLP W2 / b2
        ],
        out_specs=full((n_pad, out_pad)),
        scratch_shapes=[
            pltpu.VMEM((k * n_pad, f_pad), jnp.bfloat16),    # Chebyshev terms
            pltpu.VMEM((2 * n_pad, f_pad), jnp.float32),     # f32 recursion carries
        ],
        compiler_params=pltpu.CompilerParams(
            dimension_semantics=("arbitrary", "arbitrary"),
            vmem_limit_bytes=_derive_vmem_limit(n_pad, tm, f_pad, k, out_pad),
        ),
    )(a_p, x_p, w1, b1, w2, b2, mw1, mb1, mw2, mb2)
    return out_p[:n, :out]


# ----------------------------------------------------------------------------
# Pure-JAX reference (f32) for a tolerance check
# ----------------------------------------------------------------------------
def chebnet_reference(a_norm, x, params, *, k):
    lhat = -a_norm
    def cheb(x0, w, b):
        terms = [x0]
        if k > 1:
            terms.append(lhat @ x0)
        for _ in range(2, k):
            terms.append(2.0 * (lhat @ terms[-1]) - terms[-2])
        return jnp.concatenate(terms, axis=-1) @ w + b
    hh = jax.nn.relu(cheb(x, params["cheb1_w"], params["cheb1_b"]))
    hh = jax.nn.relu(cheb(hh, params["cheb2_w"], params["cheb2_b"]))
    m = jax.nn.relu(hh @ params["mlp_w1"] + params["mlp_b1"])
    return m @ params["mlp_w2"] + params["mlp_b2"]


# ----------------------------------------------------------------------------
# Deterministic parameter / graph construction
# ----------------------------------------------------------------------------
def _linear_init(key, fan_in, fan_out):
    # PyTorch nn.Linear default: U(-1/sqrt(fan_in), 1/sqrt(fan_in)).
    kw, kb = jax.random.split(key)
    bound = 1.0 / jnp.sqrt(jnp.float32(fan_in))
    w = jax.random.uniform(kw, (fan_in, fan_out), jnp.float32, -bound, bound)
    b = jax.random.uniform(kb, (fan_out,), jnp.float32, -bound, bound)
    return w, b


def make_params(key, in_feats, hidden_feats, out_feats, k):
    keys = jax.random.split(key, 4)
    c1w, c1b = _linear_init(keys[0], k * in_feats, hidden_feats)
    c2w, c2b = _linear_init(keys[1], k * hidden_feats, hidden_feats)
    m1w, m1b = _linear_init(keys[2], hidden_feats, hidden_feats)
    m2w, m2b = _linear_init(keys[3], hidden_feats, out_feats)
    return {
        "cheb1_w": c1w, "cheb1_b": c1b,
        "cheb2_w": c2w, "cheb2_b": c2b,
        "mlp_w1": m1w, "mlp_b1": m1b,
        "mlp_w2": m2w, "mlp_b2": m2b,
    }


def make_graph(key, n):
    # Random symmetric adjacency, no self loops; D^{-1/2} A D^{-1/2}.
    upper = jax.random.bernoulli(key, 0.3, (n, n)).astype(jnp.float32)
    upper = jnp.triu(upper, k=1)
    adj = upper + upper.T
    deg = jnp.maximum(adj.sum(axis=1), 1.0)
    d_inv_sqrt = deg ** -0.5
    a_norm = d_inv_sqrt[:, None] * adj * d_inv_sqrt[None, :]
    return a_norm.astype(jnp.float32)


# ----------------------------------------------------------------------------
if __name__ == "__main__":
    N, IN_FEATS, HIDDEN, OUT_FEATS, K = 16, 4, 32, 8, 3

    root = jax.random.PRNGKey(0)
    k_graph, k_feat, k_params = jax.random.split(root, 3)

    a_norm = make_graph(k_graph, N)
    features = jax.random.normal(k_feat, (N, IN_FEATS), jnp.float32)
    params = make_params(k_params, IN_FEATS, HIDDEN, OUT_FEATS, K)

    out = chebnet_forward(a_norm, features, params, k=K)
    out = jax.block_until_ready(out)
    assert out.shape == (N, OUT_FEATS) and out.dtype == jnp.float32

    # Tolerance check vs. an f32 reference (kernel path uses bf16 operands).
    ref = chebnet_reference(a_norm, features, params, k=K)
    tol = 5e-2 * float(jnp.max(jnp.abs(ref))) + 5e-2
    err = float(jnp.max(jnp.abs(out - ref)))
    assert err < tol, f"kernel/reference mismatch: max abs err {err} (tol {tol})"

    print("KERNEL_OK")
</pallas_src>

<mosaic_0001>
module attributes {stable_mosaic.version = 11 : i64} {
  func.func @_chebnet_fused_kernel(%arg0: i32, %arg1: i32, %arg2: memref<128x128xbf16, #tpu.memory_space<vmem>>, %arg3: memref<128x128xbf16, #tpu.memory_space<vmem>>, %arg4: memref<384x128xbf16, #tpu.memory_space<vmem>>, %arg5: memref<1x128xf32, #tpu.memory_space<vmem>>, %arg6: memref<384x128xbf16, #tpu.memory_space<vmem>>, %arg7: memref<1x128xf32, #tpu.memory_space<vmem>>, %arg8: memref<128x128xbf16, #tpu.memory_space<vmem>>, %arg9: memref<1x128xf32, #tpu.memory_space<vmem>>, %arg10: memref<128x128xbf16, #tpu.memory_space<vmem>>, %arg11: memref<1x128xf32, #tpu.memory_space<vmem>>, %arg12: memref<128x128xf32, #tpu.memory_space<vmem>>, %arg13: memref<384x128xbf16, #tpu.memory_space<vmem>>, %arg14: memref<256x128xf32, #tpu.memory_space<vmem>>) attributes {dimension_semantics = [#tpu.dimension_semantics<arbitrary>, #tpu.dimension_semantics<arbitrary>], iteration_bounds = array<i64: 4, 1>, scalar_prefetch = 0 : i64, scratch_operands = 2 : i64, tpu.core_type = #tpu.core_type<tc>, window_params = [{transform_indices = @transform_0, window_bounds = array<i64: 128, 128>}, {pipeline_mode = #tpu.pipeline_mode<synchronous>, transform_indices = @transform_1, window_bounds = array<i64: 128, 128>}, {pipeline_mode = #tpu.pipeline_mode<synchronous>, transform_indices = @transform_2, window_bounds = array<i64: 384, 128>}, {pipeline_mode = #tpu.pipeline_mode<synchronous>, transform_indices = @transform_3, window_bounds = array<i64: 1, 128>}, {pipeline_mode = #tpu.pipeline_mode<synchronous>, transform_indices = @transform_4, window_bounds = array<i64: 384, 128>}, {pipeline_mode = #tpu.pipeline_mode<synchronous>, transform_indices = @transform_5, window_bounds = array<i64: 1, 128>}, {pipeline_mode = #tpu.pipeline_mode<synchronous>, transform_indices = @transform_6, window_bounds = array<i64: 128, 128>}, {pipeline_mode = #tpu.pipeline_mode<synchronous>, transform_indices = @transform_7, window_bounds = array<i64: 1, 128>}, {pipeline_mode = #tpu.pipeline_mode<synchronous>, transform_indices = @transform_8, window_bounds = array<i64: 128, 128>}, {pipeline_mode = #tpu.pipeline_mode<synchronous>, transform_indices = @transform_9, window_bounds = array<i64: 1, 128>}, {pipeline_mode = #tpu.pipeline_mode<synchronous>, transform_indices = @transform_10, window_bounds = array<i64: 128, 128>}]} {
    %c128_i32 = arith.constant 128 : i32
    %0 = arith.muli %arg1, %c128_i32 : i32
    %1 = tpu.assume_multiple %0, 128 : i32
    %c0 = arith.constant 0 : index
    %c0_0 = arith.constant 0 : index
    %2 = vector.load %arg2[%c0, %c0_0] : memref<128x128xbf16, #tpu.memory_space<vmem>>, vector<128x128xbf16>
    %c2_i32 = arith.constant 2 : i32
    %3 = arith.cmpi sge, %arg0, %c2_i32 : i32
    %c2_i32_1 = arith.constant 2 : i32
    %4 = arith.subi %arg0, %c2_i32_1 : i32
    %5 = arith.select %3, %4, %arg0 : i32
    %c1_i32 = arith.constant 1 : i32
    %6 = arith.addi %5, %c1_i32 : i32
    %c0_i32 = arith.constant 0 : i32
    %7 = arith.cmpi eq, %arg0, %c0_i32 : i32
    %8 = arith.extui %7 : i1 to i32
    %c0_i32_2 = arith.constant 0 : i32
    %9 = arith.cmpi ne, %8, %c0_i32_2 : i32
    scf.if %9 {
      %19 = arith.index_cast %1 : i32 to index
      %c0_8 = arith.constant 0 : index
      %20 = vector.load %arg3[%19, %c0_8] : memref<128x128xbf16, #tpu.memory_space<vmem>>, vector<128x128xbf16>
      %c0_i32_9 = arith.constant 0 : i32
      %21 = arith.addi %c0_i32_9, %1 : i32
      %22 = tpu.assume_multiple %21, 128 : i32
      %23 = arith.index_cast %22 : i32 to index
      %c0_10 = arith.constant 0 : index
      %24 = vector.load %arg13[%23, %c0_10] : memref<384x128xbf16, #tpu.memory_space<vmem>>, vector<128x128xbf16>
      tpu.vector_store %arg13[%23, %c0_10], %20 {strides = array<i32>} : memref<384x128xbf16, #tpu.memory_space<vmem>>, vector<128x128xbf16>,
      %c0_11 = arith.constant 0 : index
      %c0_12 = arith.constant 0 : index
      %25 = vector.load %arg3[%c0_11, %c0_12] : memref<128x128xbf16, #tpu.memory_space<vmem>>, vector<128x128xbf16>
      %cst = arith.constant dense<0.000000e+00> : vector<128x128xf32>
      %26 = tpu.matmul %2, %25, %cst {dimension_numbers = #tpu.dot_dimension_numbers<[1], [0], [0], [1], [0, 0, 1, 1], [], []>} : vector<128x128xbf16>, vector<128x128xbf16>, vector<128x128xf32> -> vector<128x128xf32>
      %27 = arith.truncf %26 : vector<128x128xf32> to vector<128x128xbf16>
      %c128_i32_13 = arith.constant 128 : i32
      %28 = arith.addi %c128_i32_13, %1 : i32
      %29 = tpu.assume_multiple %28, 128 : i32
      %30 = arith.index_cast %29 : i32 to index
      %c0_14 = arith.constant 0 : index
      %31 = vector.load %arg13[%30, %c0_14] : memref<384x128xbf16, #tpu.memory_space<vmem>>, vector<128x128xbf16>
      tpu.vector_store %arg13[%30, %c0_14], %27 {strides = array<i32>} : memref<384x128xbf16, #tpu.memory_space<vmem>>, vector<128x128xbf16>,
      %32 = arith.extf %20 : vector<128x128xbf16> to vector<128x128xf32>
      %c0_i32_15 = arith.constant 0 : i32
      %33 = arith.addi %c0_i32_15, %1 : i32
      %34 = tpu.assume_multiple %33, 128 : i32
      %35 = arith.index_cast %34 : i32 to index
      %c0_16 = arith.constant 0 : index
      %36 = vector.load %arg14[%35, %c0_16] : memref<256x128xf32, #tpu.memory_space<vmem>>, vector<128x128xf32>
      tpu.vector_store %arg14[%35, %c0_16], %32 {strides = array<i32>} : memref<256x128xf32, #tpu.memory_space<vmem>>, vector<128x128xf32>,
      %c128_i32_17 = arith.constant 128 : i32
      %37 = arith.addi %c128_i32_17, %1 : i32
      %38 = tpu.assume_multiple %37, 128 : i32
      %39 = arith.index_cast %38 : i32 to index
      %c0_18 = arith.constant 0 : index
      %40 = vector.load %arg14[%39, %c0_18] : memref<256x128xf32, #tpu.memory_space<vmem>>, vector<128x128xf32>
      tpu.vector_store %arg14[%39, %c0_18], %26 {strides = array<i32>} : memref<256x128xf32, #tpu.memory_space<vmem>>, vector<128x128xf32>,
    } else {
    }
    %c0_i32_3 = arith.constant 0 : i32
    %10 = arith.cmpi ne, %arg0, %c0_i32_3 : i32
    %11 = arith.extui %10 : i1 to i32
    %c0_i32_4 = arith.constant 0 : i32
    %12 = arith.cmpi ne, %11, %c0_i32_4 : i32
    scf.if %12 {
      %c1_i32_8 = arith.constant 1 : i32
      %19 = arith.subi %6, %c1_i32_8 : i32
      %c128_i32_9 = arith.constant 128 : i32
      %20 = arith.muli %19, %c128_i32_9 : i32
      %c0_i32_10 = arith.constant 0 : i32
      %21 = arith.addi %20, %c0_i32_10 : i32
      %22 = tpu.assume_multiple %21, 128 : i32
      %23 = arith.index_cast %22 : i32 to index
      %c0_11 = arith.constant 0 : index
      %24 = vector.load %arg13[%23, %c0_11] : memref<384x128xbf16, #tpu.memory_space<vmem>>, vector<128x128xbf16>
      %cst = arith.constant dense<0.000000e+00> : vector<128x128xf32>
      %25 = tpu.matmul %2, %24, %cst {dimension_numbers = #tpu.dot_dimension_numbers<[1], [0], [0], [1], [0, 0, 1, 1], [], []>} : vector<128x128xbf16>, vector<128x128xbf16>, vector<128x128xf32> -> vector<128x128xf32>
      %c2_i32_12 = arith.constant 2 : i32
      %c0_i32_13 = arith.constant 0 : i32
      %26 = arith.cmpi eq, %c2_i32_12, %c0_i32_13 : i32
      %c1_i32_14 = arith.constant 1 : i32
      %27 = arith.select %26, %c1_i32_14, %c2_i32_12 : i32
      %28 = arith.remsi %6, %27 : i32
      %c0_i32_15 = arith.constant 0 : i32
      %29 = arith.cmpi ne, %28, %c0_i32_15 : i32
      %c0_i32_16 = arith.constant 0 : i32
      %30 = arith.cmpi slt, %28, %c0_i32_16 : i32
      %c0_i32_17 = arith.constant 0 : i32
      %31 = arith.cmpi slt, %27, %c0_i32_17 : i32
      %32 = arith.xori %30, %31 : i1
      %33 = arith.andi %32, %29 : i1
      %34 = arith.addi %28, %27 : i32
      %35 = arith.select %33, %34, %28 : i32
      %c128_i32_18 = arith.constant 128 : i32
      %36 = arith.muli %35, %c128_i32_18 : i32
      %37 = arith.addi %36, %1 : i32
      %38 = tpu.assume_multiple %37, 128 : i32
      %39 = arith.index_cast %38 : i32 to index
      %c0_19 = arith.constant 0 : index
      %40 = vector.load %arg14[%39, %c0_19] : memref<256x128xf32, #tpu.memory_space<vmem>>, vector<128x128xf32>
      %c2_i32_20 = arith.constant 2 : i32
      %41 = arith.cmpi eq, %arg0, %c2_i32_20 : i32
      %cst_21 = arith.constant 2.000000e+00 : f32
      %42 = vector.broadcast %cst_21 : f32 to vector<128x128xf32>
      %43 = arith.mulf %42, %25 : vector<128x128xf32>
      %44 = arith.subf %43, %40 : vector<128x128xf32>
      %45 = arith.select %41, %25, %44 : vector<128x128xf32>
      %c2_i32_22 = arith.constant 2 : i32
      %c0_i32_23 = arith.constant 0 : i32
      %46 = arith.cmpi eq, %c2_i32_22, %c0_i32_23 : i32
      %c1_i32_24 = arith.constant 1 : i32
      %47 = arith.select %46, %c1_i32_24, %c2_i32_22 : i32
      %48 = arith.remsi %6, %47 : i32
      %c0_i32_25 = arith.constant 0 : i32
      %49 = arith.cmpi ne, %48, %c0_i32_25 : i32
      %c0_i32_26 = arith.constant 0 : i32
      %50 = arith.cmpi slt, %48, %c0_i32_26 : i32
      %c0_i32_27 = arith.constant 0 : i32
      %51 = arith.cmpi slt, %47, %c0_i32_27 : i32
      %52 = arith.xori %50, %51 : i1
      %53 = arith.andi %52, %49 : i1
      %54 = arith.addi %48, %47 : i32
      %55 = arith.select %53, %54, %48 : i32
      %c128_i32_28 = arith.constant 128 : i32
      %56 = arith.muli %55, %c128_i32_28 : i32
      %57 = arith.addi %56, %1 : i32
      %58 = tpu.assume_multiple %57, 128 : i32
      %59 = arith.index_cast %58 : i32 to index
      %c0_29 = arith.constant 0 : index
      %60 = vector.load %arg14[%59, %c0_29] : memref<256x128xf32, #tpu.memory_space<vmem>>, vector<128x128xf32>
      tpu.vector_store %arg14[%59, %c0_29], %45 {strides = array<i32>} : memref<256x128xf32, #tpu.memory_space<vmem>>, vector<128x128xf32>,
      %61 = arith.truncf %45 : vector<128x128xf32> to vector<128x128xbf16>
      %c128_i32_30 = arith.constant 128 : i32
      %62 = arith.muli %6, %c128_i32_30 : i32
      %63 = arith.addi %62, %1 : i32
      %64 = tpu.assume_multiple %63, 128 : i32
      %65 = arith.index_cast %64 : i32 to index
      %c0_31 = arith.constant 0 : index
      %66 = vector.load %arg13[%65, %c0_31] : memref<384x128xbf16, #tpu.memory_space<vmem>>, vector<128x128xbf16>
      tpu.vector_store %arg13[%65, %c0_31], %61 {strides = array<i32>} : memref<384x128xbf16, #tpu.memory_space<vmem>>, vector<128x128xbf16>,
    } else {
    }
    %c1_i32_5 = arith.constant 1 : i32
    %13 = arith.cmpi eq, %arg0, %c1_i32_5 : i32
    %14 = arith.extui %13 : i1 to i32
    %c0_i32_6 = arith.constant 0 : i32
    %15 = arith.cmpi ne, %14, %c0_i32_6 : i32
    scf.if %15 {
      %c0_i32_8 = arith.constant 0 : i32
      %19 = arith.addi %c0_i32_8, %1 : i32
      %20 = tpu.assume_multiple %19, 128 : i32
      %21 = arith.index_cast %20 : i32 to index
      %c0_9 = arith.constant 0 : index
      %22 = vector.load %arg13[%21, %c0_9] : memref<384x128xbf16, #tpu.memory_space<vmem>>, vector<128x128xbf16>
      %c128_i32_10 = arith.constant 128 : i32
      %23 = arith.addi %c128_i32_10, %1 : i32
      %24 = tpu.assume_multiple %23, 128 : i32
      %25 = arith.index_cast %24 : i32 to index
      %c0_11 = arith.constant 0 : index
      %26 = vector.load %arg13[%25, %c0_11] : memref<384x128xbf16, #tpu.memory_space<vmem>>, vector<128x128xbf16>
      %c256_i32 = arith.constant 256 : i32
      %27 = arith.addi %c256_i32, %1 : i32
      %28 = tpu.assume_multiple %27, 128 : i32
      %29 = arith.index_cast %28 : i32 to index
      %c0_12 = arith.constant 0 : index
      %30 = vector.load %arg13[%29, %c0_12] : memref<384x128xbf16, #tpu.memory_space<vmem>>, vector<128x128xbf16>
      %31 = tpu.concatenate %22, %26, %30 in 1 : vector<128x128xbf16>, vector<128x128xbf16>, vector<128x128xbf16> -> vector<128x384xbf16>
      %c0_13 = arith.constant 0 : index
      %c0_14 = arith.constant 0 : index
      %32 = vector.load %arg4[%c0_13, %c0_14] : memref<384x128xbf16, #tpu.memory_space<vmem>>, vector<384x128xbf16>
      %cst = arith.constant dense<0.000000e+00> : vector<128x128xf32>
      %33 = tpu.matmul %31, %32, %cst {dimension_numbers = #tpu.dot_dimension_numbers<[1], [0], [0], [1], [0, 0, 1, 1], [], []>} : vector<128x384xbf16>, vector<384x128xbf16>, vector<128x128xf32> -> vector<128x128xf32>
      %c0_15 = arith.constant 0 : index
      %c0_16 = arith.constant 0 : index
      %34 = vector.load %arg5[%c0_15, %c0_16] : memref<1x128xf32, #tpu.memory_space<vmem>>, vector<1x128xf32>
      %35 = vector.broadcast %34 : vector<1x128xf32> to vector<128x128xf32>
      %36 = arith.addf %33, %35 : vector<128x128xf32>
      %cst_17 = arith.constant 0.000000e+00 : f32
      %37 = vector.broadcast %cst_17 : f32 to vector<128x128xf32>
      %38 = arith.maximumf %36, %37 : vector<128x128xf32>
      %39 = arith.truncf %38 : vector<128x128xf32> to vector<128x128xbf16>
      %c0_i32_18 = arith.constant 0 : i32
      %40 = arith.addi %c0_i32_18, %1 : i32
      %41 = tpu.assume_multiple %40, 128 : i32
      %42 = arith.index_cast %41 : i32 to index
      %c0_19 = arith.constant 0 : index
      %43 = vector.load %arg13[%42, %c0_19] : memref<384x128xbf16, #tpu.memory_space<vmem>>, vector<128x128xbf16>
      tpu.vector_store %arg13[%42, %c0_19], %39 {strides = array<i32>} : memref<384x128xbf16, #tpu.memory_space<vmem>>, vector<128x128xbf16>,
      %c0_i32_20 = arith.constant 0 : i32
      %44 = arith.addi %c0_i32_20, %1 : i32
      %45 = tpu.assume_multiple %44, 128 : i32
      %46 = arith.index_cast %45 : i32 to index
      %c0_21 = arith.constant 0 : index
      %47 = vector.load %arg14[%46, %c0_21] : memref<256x128xf32, #tpu.memory_space<vmem>>, vector<128x128xf32>
      tpu.vector_store %arg14[%46, %c0_21], %38 {strides = array<i32>} : memref<256x128xf32, #tpu.memory_space<vmem>>, vector<128x128xf32>,
    } else {
    }
    %c3_i32 = arith.constant 3 : i32
    %16 = arith.cmpi eq, %arg0, %c3_i32 : i32
    %17 = arith.extui %16 : i1 to i32
    %c0_i32_7 = arith.constant 0 : i32
    %18 = arith.cmpi ne, %17, %c0_i32_7 : i32
    scf.if %18 {
      %c0_i32_8 = arith.constant 0 : i32
      %19 = arith.addi %c0_i32_8, %1 : i32
      %20 = tpu.assume_multiple %19, 128 : i32
      %21 = arith.index_cast %20 : i32 to index
      %c0_9 = arith.constant 0 : index
      %22 = vector.load %arg13[%21, %c0_9] : memref<384x128xbf16, #tpu.memory_space<vmem>>, vector<128x128xbf16>
      %c128_i32_10 = arith.constant 128 : i32
      %23 = arith.addi %c128_i32_10, %1 : i32
      %24 = tpu.assume_multiple %23, 128 : i32
      %25 = arith.index_cast %24 : i32 to index
      %c0_11 = arith.constant 0 : index
      %26 = vector.load %arg13[%25, %c0_11] : memref<384x128xbf16, #tpu.memory_space<vmem>>, vector<128x128xbf16>
      %c256_i32 = arith.constant 256 : i32
      %27 = arith.addi %c256_i32, %1 : i32
      %28 = tpu.assume_multiple %27, 128 : i32
      %29 = arith.index_cast %28 : i32 to index
      %c0_12 = arith.constant 0 : index
      %30 = vector.load %arg13[%29, %c0_12] : memref<384x128xbf16, #tpu.memory_space<vmem>>, vector<128x128xbf16>
      %31 = tpu.concatenate %22, %26, %30 in 1 : vector<128x128xbf16>, vector<128x128xbf16>, vector<128x128xbf16> -> vector<128x384xbf16>
      %c0_13 = arith.constant 0 : index
      %c0_14 = arith.constant 0 : index
      %32 = vector.load %arg6[%c0_13, %c0_14] : memref<384x128xbf16, #tpu.memory_space<vmem>>, vector<384x128xbf16>
      %cst = arith.constant dense<0.000000e+00> : vector<128x128xf32>
      %33 = tpu.matmul %31, %32, %cst {dimension_numbers = #tpu.dot_dimension_numbers<[1], [0], [0], [1], [0, 0, 1, 1], [], []>} : vector<128x384xbf16>, vector<384x128xbf16>, vector<128x128xf32> -> vector<128x128xf32>
      %c0_15 = arith.constant 0 : index
      %c0_16 = arith.constant 0 : index
      %34 = vector.load %arg7[%c0_15, %c0_16] : memref<1x128xf32, #tpu.memory_space<vmem>>, vector<1x128xf32>
      %35 = vector.broadcast %34 : vector<1x128xf32> to vector<128x128xf32>
      %36 = arith.addf %33, %35 : vector<128x128xf32>
      %cst_17 = arith.constant 0.000000e+00 : f32
      %37 = vector.broadcast %cst_17 : f32 to vector<128x128xf32>
      %38 = arith.maximumf %36, %37 : vector<128x128xf32>
      %39 = arith.truncf %38 : vector<128x128xf32> to vector<128x128xbf16>
      %c0_18 = arith.constant 0 : index
      %c0_19 = arith.constant 0 : index
      %40 = vector.load %arg8[%c0_18, %c0_19] : memref<128x128xbf16, #tpu.memory_space<vmem>>, vector<128x128xbf16>
      %cst_20 = arith.constant dense<0.000000e+00> : vector<128x128xf32>
      %41 = tpu.matmul %39, %40, %cst_20 {dimension_numbers = #tpu.dot_dimension_numbers<[1], [0], [0], [1], [0, 0, 1, 1], [], []>} : vector<128x128xbf16>, vector<128x128xbf16>, vector<128x128xf32> -> vector<128x128xf32>
      %c0_21 = arith.constant 0 : index
      %c0_22 = arith.constant 0 : index
      %42 = vector.load %arg9[%c0_21, %c0_22] : memref<1x128xf32, #tpu.memory_space<vmem>>, vector<1x128xf32>
      %43 = vector.broadcast %42 : vector<1x128xf32> to vector<128x128xf32>
      %44 = arith.addf %41, %43 : vector<128x128xf32>
      %cst_23 = arith.constant 0.000000e+00 : f32
      %45 = vector.broadcast %cst_23 : f32 to vector<128x128xf32>
      %46 = arith.maximumf %44, %45 : vector<128x128xf32>
      %47 = arith.truncf %46 : vector<128x128xf32> to vector<128x128xbf16>
      %c0_24 = arith.constant 0 : index
      %c0_25 = arith.constant 0 : index
      %48 = vector.load %arg10[%c0_24, %c0_25] : memref<128x128xbf16, #tpu.memory_space<vmem>>, vector<128x128xbf16>
      %cst_26 = arith.constant dense<0.000000e+00> : vector<128x128xf32>
      %49 = tpu.matmul %47, %48, %cst_26 {dimension_numbers = #tpu.dot_dimension_numbers<[1], [0], [0], [1], [0, 0, 1, 1], [], []>} : vector<128x128xbf16>, vector<128x128xbf16>, vector<128x128xf32> -> vector<128x128xf32>
      %c0_27 = arith.constant 0 : index
      %c0_28 = arith.constant 0 : index
      %50 = vector.load %arg11[%c0_27, %c0_28] : memref<1x128xf32, #tpu.memory_space<vmem>>, vector<1x128xf32>
      %51 = vector.broadcast %50 : vector<1x128xf32> to vector<128x128xf32>
      %52 = arith.addf %49, %51 : vector<128x128xf32>
      %53 = arith.index_cast %1 : i32 to index
      %c0_29 = arith.constant 0 : index
      %54 = vector.load %arg12[%53, %c0_29] : memref<128x128xf32, #tpu.memory_space<vmem>>, vector<128x128xf32>
      tpu.vector_store %arg12[%53, %c0_29], %52 {strides = array<i32>} : memref<128x128xf32, #tpu.memory_space<vmem>>, vector<128x128xf32>,
    } else {
    }
    return
  }
  func.func @transform_0(%arg0: i32, %arg1: i32) -> (i32, i32) {
    %c0_i32 = arith.constant 0 : i32
    %c0_i32_0 = arith.constant 0 : i32
    return %arg1, %c0_i32 : i32, i32
  }
  func.func @transform_1(%arg0: i32, %arg1: i32) -> (i32, i32) {
    %c0_i32 = arith.constant 0 : i32
    %c0_i32_0 = arith.constant 0 : i32
    %c0_i32_1 = arith.constant 0 : i32
    return %c0_i32, %c0_i32_0 : i32, i32
  }
  func.func @transform_2(%arg0: i32, %arg1: i32) -> (i32, i32) {
    %c0_i32 = arith.constant 0 : i32
    %c0_i32_0 = arith.constant 0 : i32
    %c0_i32_1 = arith.constant 0 : i32
    return %c0_i32, %c0_i32_0 : i32, i32
  }
  func.func @transform_3(%arg0: i32, %arg1: i32) -> (i32, i32) {
    %c0_i32 = arith.constant 0 : i32
    %c0_i32_0 = arith.constant 0 : i32
    %c0_i32_1 = arith.constant 0 : i32
    return %c0_i32, %c0_i32_0 : i32, i32
  }
  func.func @transform_4(%arg0: i32, %arg1: i32) -> (i32, i32) {
    %c0_i32 = arith.constant 0 : i32
    %c0_i32_0 = arith.constant 0 : i32
    %c0_i32_1 = arith.constant 0 : i32
    return %c0_i32, %c0_i32_0 : i32, i32
  }
  func.func @transform_5(%arg0: i32, %arg1: i32) -> (i32, i32) {
    %c0_i32 = arith.constant 0 : i32
    %c0_i32_0 = arith.constant 0 : i32
    %c0_i32_1 = arith.constant 0 : i32
    return %c0_i32, %c0_i32_0 : i32, i32
  }
  func.func @transform_6(%arg0: i32, %arg1: i32) -> (i32, i32) {
    %c0_i32 = arith.constant 0 : i32
    %c0_i32_0 = arith.constant 0 : i32
    %c0_i32_1 = arith.constant 0 : i32
    return %c0_i32, %c0_i32_0 : i32, i32
  }
  func.func @transform_7(%arg0: i32, %arg1: i32) -> (i32, i32) {
    %c0_i32 = arith.constant 0 : i32
    %c0_i32_0 = arith.constant 0 : i32
    %c0_i32_1 = arith.constant 0 : i32
    return %c0_i32, %c0_i32_0 : i32, i32
  }
  func.func @transform_8(%arg0: i32, %arg1: i32) -> (i32, i32) {
    %c0_i32 = arith.constant 0 : i32
    %c0_i32_0 = arith.constant 0 : i32
    %c0_i32_1 = arith.constant 0 : i32
    return %c0_i32, %c0_i32_0 : i32, i32
  }
  func.func @transform_9(%arg0: i32, %arg1: i32) -> (i32, i32) {
    %c0_i32 = arith.constant 0 : i32
    %c0_i32_0 = arith.constant 0 : i32
    %c0_i32_1 = arith.constant 0 : i32
    return %c0_i32, %c0_i32_0 : i32, i32
  }
  func.func @transform_10(%arg0: i32, %arg1: i32) -> (i32, i32) {
    %c0_i32 = arith.constant 0 : i32
    %c0_i32_0 = arith.constant 0 : i32
    %c0_i32_1 = arith.constant 0 : i32
    return %c0_i32, %c0_i32_0 : i32, i32
  }
}

</mosaic_0001>

<llo_original>
// kernel: tpu_custom_call.1
$region0: #{tpu_custom_call.1}
  #allocation0 [shape = 'u32[]', space=smem, size = 0x4, offset = 0x4, fixed_abs, tag = 'smem constant byte address 0x4 - core index']
  #allocation1 [shape = 'u32[144,128]{1,0:T(1,128)}', space=vmem, size = 0x12000, scoped, tag = 'internal scratch']
  #allocation2 [shape = 'bf16[384,128]{1,0:T(16,128)(2,1)}', space=vmem, size = 0x18000, scoped, tag = 'scratch operand']
  #allocation3 [shape = 'f32[256,128]{1,0:T(8,128)}', space=vmem, size = 0x20000, scoped, tag = 'scratch operand']
  %s0 = inlined_call_operand.hbm [shape: bf16[128,128], index: 0, kind: input, shape index: {}]
  %s1 = inlined_call_operand.hbm [shape: bf16[128,128], index: 1, kind: input, shape index: {}]
  %s2 = inlined_call_operand.hbm [shape: bf16[384,128], index: 2, kind: input, shape index: {}]
  %s3 = inlined_call_operand.vmem [shape: f32[1,128], index: 3, kind: input, shape index: {}]
  %s4 = inlined_call_operand.hbm [shape: bf16[384,128], index: 4, kind: input, shape index: {}]
  %s5 = inlined_call_operand.vmem [shape: f32[1,128], index: 5, kind: input, shape index: {}]
  %s6 = inlined_call_operand.hbm [shape: bf16[128,128], index: 6, kind: input, shape index: {}]
  %s7 = inlined_call_operand.vmem [shape: f32[1,128], index: 7, kind: input, shape index: {}]
  %s8 = inlined_call_operand.hbm [shape: bf16[128,128], index: 8, kind: input, shape index: {}]
  %s9 = inlined_call_operand.vmem [shape: f32[1,128], index: 9, kind: input, shape index: {}]
  %s10 = inlined_call_operand.hbm [shape: f32[128,128], index: 10, kind: output, shape index: {}]
  %s11 = sld [smem:[#allocation0]]
  $region113: #{tpu_custom_call.1} parent=0
    _
  %s13 = ssub.s32 1, %s11
  %s14 = scalar_select 0, %s13, %s11
  $region1: #{tpu_custom_call.1} parent=0
    #allocation4 [shape = 'u8[32768]{0}', space=vmem, size = 0x8000, scoped, tag = 'input window, operand 0, single buffered']
    #allocation5 [shape = 's32[2]{0}', space=sflag, size = 0x8, scoped, tag = 'scoped memory for tpu_custom_call.1']
    #allocation6 [shape = 's32[2]{0}', space=sflag, size = 0x8, scoped, tag = 'scoped memory for tpu_custom_call.1']
    #allocation7 [shape = 'u8[32768]{0}', space=vmem, size = 0x8000, scoped, tag = 'input window, operand 1, single buffered']
    #allocation8 [shape = 's32[1]{0}', space=sflag, size = 0x4, scoped, tag = 'scoped memory for tpu_custom_call.1']
    #allocation9 [shape = 'u8[98304]{0}', space=vmem, size = 0x18000, scoped, tag = 'input window, operand 2, single buffered']
    #allocation10 [shape = 'u8[98304]{0}', space=vmem, size = 0x18000, scoped, tag = 'input window, operand 4, single buffered']
    #allocation11 [shape = 's32[1]{0}', space=sflag, size = 0x4, scoped, tag = 'scoped memory for tpu_custom_call.1']
    #allocation12 [shape = 'u8[32768]{0}', space=vmem, size = 0x8000, scoped, tag = 'input window, operand 6, single buffered']
    #allocation13 [shape = 'u8[32768]{0}', space=vmem, size = 0x8000, scoped, tag = 'input window, operand 8, single buffered']
    #allocation14 [shape = 's32[1]{0}', space=sflag, size = 0x4, scoped, tag = 'scoped memory for tpu_custom_call.1']
    #allocation15 [shape = 'u8[65536]{0}', space=vmem, size = 0x10000, scoped, tag = 'output window, operand 0, single buffered']
    %15 = vsyncpa [#allocation5], 0
    %16 = vsyncpa [#allocation8], 0
    %17 = vsyncpa [#allocation11], 0
    %18 = vsyncpa [#allocation14], 0
    %19 = vsyncpa [#allocation6], 0
    loop: start=0, step=1, limit=6
    $region2: #{tpu_custom_call.1} parent=1 // loop_pre_header
      _
    $region3: #{tpu_custom_call.1} parent=1 // loop_header
      %s21 = sphi 0, %s25
      %p22 = scmp.ge.s32.totalorder %s21, 6
      %s28 = sphi 0, %s40
      %s29 = sphi 0, %s36
      %s30 = sphi 0, %s28
      %s31 = sphi 0, %s29
      %s32 = sphi 0, %s30
      %s33 = sphi 0, %s31
      %s43 = sphi 0, %s45
      %s46 = sphi 0, %s43
      %s47 = sphi 0, %s46
      %s63 = sphi 0, %s47
      %s67 = sphi 0, %s67
      %s69 = sphi 0, %s67
      %s70 = sphi 0, %s69
      %s84 = sphi 0, %s70
      %s88 = sphi 0, %s88
      %s90 = sphi 0, %s88
      %s91 = sphi 0, %s90
      %s105 = sphi 0, %s91
      %s109 = sphi 0, %s109
      %s111 = sphi 0, %s109
      %s112 = sphi 0, %s111
      %s126 = sphi 0, %s112
      %s130 = sphi 0, %s130
      %s132 = sphi 0, %s130
      %s133 = sphi 0, %s132
      %s147 = sphi 0, %s133
      %s151 = sphi 0, %s151
      %s153 = sphi 0, %s151
      %s154 = sphi 0, %s153
      %s168 = sphi 0, %s154
      %s172 = sphi 0, %s172
      %s174 = sphi 0, %s172
      %s175 = sphi 0, %s174
      %s189 = sphi 0, %s175
      %s193 = sphi 0, %s193
      %s195 = sphi 0, %s193
      %s196 = sphi 0, %s195
      %s210 = sphi 0, %s196
      %s214 = sphi 0, %s214
      %s216 = sphi 0, %s214
      %s217 = sphi 0, %s216
      %s231 = sphi 0, %s217
      %s235 = sphi 0, %s235
      %s237 = sphi 0, %s235
      %s238 = sphi 0, %s237
      %s252 = sphi 0, %s238
      %s256 = sphi 0, %s256
      %s258 = sphi 0, %s256
      %s259 = sphi 0, %s258
      %s273 = sphi 0, %s259
    $region4: #{tpu_custom_call.1} parent=1 // loop_header_branch
      %24 = sbr.rel (%p22) target = $region8
    $region5: #{tpu_custom_call.1} parent=1 // loop_body
      %s26 = ssub.s32 %s21, 1
      %s27 = ssub.s32 %s21, 2
      %s34 = sadd.s32 1, %s29
      %p35 = scmp.ge.s32.totalorder %s34, 1
      %s36 = scalar_select %p35, 0, %s34
      %s37 = sadd.s32 1, %s28
      %s38 = scalar_select %p35, %s37, %s28
      %p39 = scmp.ge.s32.totalorder %s38, 4
      %s40 = scalar_select %p39, 0, %s38
      %s41 = ssub.s32 %s29, %s36
      %p42 = scmp.eq.s32.totalorder %s41, 0
      %s44 = sadd.s32 %s43, 1
      %s45 = scalar_select %p42, %s43, %s44
      %p48 = pneg %p42
      %p49 = scmp.eq.s32.totalorder %s21, 3
      %p50 = por %p48, %p49
      %p51 = scmp.ne.s32.totalorder %s43, %s46
      %p52 = scmp.eq.s32.totalorder %s21, 0
      %p53 = por %p51, %p52
      %p54 = scmp.ne.s32.totalorder %s43, %s46
      %p55 = scmp.eq.s32.totalorder %s26, 3
      %p56 = por %p54, %p55
      %p57 = scmp.ne.s32.totalorder %s46, %s47
      %p58 = scmp.eq.s32.totalorder %s26, 0
      %p59 = por %p57, %p58
      %p60 = scmp.ne.s32.totalorder %s46, %s47
      %p61 = scmp.eq.s32.totalorder %s27, 3
      %p62 = por %p60, %p61
      %p64 = scmp.ne.s32.totalorder %s47, %s63
      %p65 = scmp.eq.s32.totalorder %s27, 0
      %p66 = por %p64, %p65
      %s68 = sadd.s32 %s67, 1
      %p71 = scmp.eq.s32.totalorder %s21, 3
      %p72 = scmp.ne.s32.totalorder %s67, %s69
      %p73 = scmp.eq.s32.totalorder %s21, 0
      %p74 = por %p72, %p73
      %p75 = scmp.ne.s32.totalorder %s67, %s69
      %p76 = scmp.eq.s32.totalorder %s26, 3
      %p77 = por %p75, %p76
      %p78 = scmp.ne.s32.totalorder %s69, %s70
      %p79 = scmp.eq.s32.totalorder %s26, 0
      %p80 = por %p78, %p79
      %p81 = scmp.ne.s32.totalorder %s69, %s70
      %p82 = scmp.eq.s32.totalorder %s27, 3
      %p83 = por %p81, %p82
      %p85 = scmp.ne.s32.totalorder %s70, %s84
      %p86 = scmp.eq.s32.totalorder %s27, 0
      %p87 = por %p85, %p86
      %s89 = sadd.s32 %s88, 1
      %p92 = scmp.eq.s32.totalorder %s21, 3
      %p93 = scmp.ne.s32.totalorder %s88, %s90
      %p94 = scmp.eq.s32.totalorder %s21, 0
      %p95 = por %p93, %p94
      %p96 = scmp.ne.s32.totalorder %s88, %s90
      %p97 = scmp.eq.s32.totalorder %s26, 3
      %p98 = por %p96, %p97
      %p99 = scmp.ne.s32.totalorder %s90, %s91
      %p100 = scmp.eq.s32.totalorder %s26, 0
      %p101 = por %p99, %p100
      %p102 = scmp.ne.s32.totalorder %s90, %s91
      %p103 = scmp.eq.s32.totalorder %s27, 3
      %p104 = por %p102, %p103
      %p106 = scmp.ne.s32.totalorder %s91, %s105
      %p107 = scmp.eq.s32.totalorder %s27, 0
      %p108 = por %p106, %p107
      %s110 = sadd.s32 %s109, 1
      %p113 = scmp.eq.s32.totalorder %s21, 3
      %p114 = scmp.ne.s32.totalorder %s109, %s111
      %p115 = scmp.eq.s32.totalorder %s21, 0
      %p116 = por %p114, %p115
      %p117 = scmp.ne.s32.totalorder %s109, %s111
      %p118 = scmp.eq.s32.totalorder %s26, 3
      %p119 = por %p117, %p118
      %p120 = scmp.ne.s32.totalorder %s111, %s112
      %p121 = scmp.eq.s32.totalorder %s26, 0
      %p122 = por %p120, %p121
      %p123 = scmp.ne.s32.totalorder %s111, %s112
      %p124 = scmp.eq.s32.totalorder %s27, 3
      %p125 = por %p123, %p124
      %p127 = scmp.ne.s32.totalorder %s112, %s126
      %p128 = scmp.eq.s32.totalorder %s27, 0
      %p129 = por %p127, %p128
      %s131 = sadd.s32 %s130, 1
      %p134 = scmp.eq.s32.totalorder %s21, 3
      %p135 = scmp.ne.s32.totalorder %s130, %s132
      %p136 = scmp.eq.s32.totalorder %s21, 0
      %p137 = por %p135, %p136
      %p138 = scmp.ne.s32.totalorder %s130, %s132
      %p139 = scmp.eq.s32.totalorder %s26, 3
      %p140 = por %p138, %p139
      %p141 = scmp.ne.s32.totalorder %s132, %s133
      %p142 = scmp.eq.s32.totalorder %s26, 0
      %p143 = por %p141, %p142
      %p144 = scmp.ne.s32.totalorder %s132, %s133
      %p145 = scmp.eq.s32.totalorder %s27, 3
      %p146 = por %p144, %p145
      %p148 = scmp.ne.s32.totalorder %s133, %s147
      %p149 = scmp.eq.s32.totalorder %s27, 0
      %p150 = por %p148, %p149
      %s152 = sadd.s32 %s151, 1
      %p155 = scmp.eq.s32.totalorder %s21, 3
      %p156 = scmp.ne.s32.totalorder %s151, %s153
      %p157 = scmp.eq.s32.totalorder %s21, 0
      %p158 = por %p156, %p157
      %p159 = scmp.ne.s32.totalorder %s151, %s153
      %p160 = scmp.eq.s32.totalorder %s26, 3
      %p161 = por %p159, %p160
      %p162 = scmp.ne.s32.totalorder %s153, %s154
      %p163 = scmp.eq.s32.totalorder %s26, 0
      %p164 = por %p162, %p163
      %p165 = scmp.ne.s32.totalorder %s153, %s154
      %p166 = scmp.eq.s32.totalorder %s27, 3
      %p167 = por %p165, %p166
      %p169 = scmp.ne.s32.totalorder %s154, %s168
      %p170 = scmp.eq.s32.totalorder %s27, 0
      %p171 = por %p169, %p170
      %s173 = sadd.s32 %s172, 1
      %p176 = scmp.eq.s32.totalorder %s21, 3
      %p177 = scmp.ne.s32.totalorder %s172, %s174
      %p178 = scmp.eq.s32.totalorder %s21, 0
      %p179 = por %p177, %p178
      %p180 = scmp.ne.s32.totalorder %s172, %s174
      %p181 = scmp.eq.s32.totalorder %s26, 3
      %p182 = por %p180, %p181
      %p183 = scmp.ne.s32.totalorder %s174, %s175
      %p184 = scmp.eq.s32.totalorder %s26, 0
      %p185 = por %p183, %p184
      %p186 = scmp.ne.s32.totalorder %s174, %s175
      %p187 = scmp.eq.s32.totalorder %s27, 3
      %p188 = por %p186, %p187
      %p190 = scmp.ne.s32.totalorder %s175, %s189
      %p191 = scmp.eq.s32.totalorder %s27, 0
      %p192 = por %p190, %p191
      %s194 = sadd.s32 %s193, 1
      %p197 = scmp.eq.s32.totalorder %s21, 3
      %p198 = scmp.ne.s32.totalorder %s193, %s195
      %p199 = scmp.eq.s32.totalorder %s21, 0
      %p200 = por %p198, %p199
      %p201 = scmp.ne.s32.totalorder %s193, %s195
      %p202 = scmp.eq.s32.totalorder %s26, 3
      %p203 = por %p201, %p202
      %p204 = scmp.ne.s32.totalorder %s195, %s196
      %p205 = scmp.eq.s32.totalorder %s26, 0
      %p206 = por %p204, %p205
      %p207 = scmp.ne.s32.totalorder %s195, %s196
      %p208 = scmp.eq.s32.totalorder %s27, 3
      %p209 = por %p207, %p208
      %p211 = scmp.ne.s32.totalorder %s196, %s210
      %p212 = scmp.eq.s32.totalorder %s27, 0
      %p213 = por %p211, %p212
      %s215 = sadd.s32 %s214, 1
      %p218 = scmp.eq.s32.totalorder %s21, 3
      %p219 = scmp.ne.s32.totalorder %s214, %s216
      %p220 = scmp.eq.s32.totalorder %s21, 0
      %p221 = por %p219, %p220
      %p222 = scmp.ne.s32.totalorder %s214, %s216
      %p223 = scmp.eq.s32.totalorder %s26, 3
      %p224 = por %p222, %p223
      %p225 = scmp.ne.s32.totalorder %s216, %s217
      %p226 = scmp.eq.s32.totalorder %s26, 0
      %p227 = por %p225, %p226
      %p228 = scmp.ne.s32.totalorder %s216, %s217
      %p229 = scmp.eq.s32.totalorder %s27, 3
      %p230 = por %p228, %p229
      %p232 = scmp.ne.s32.totalorder %s217, %s231
      %p233 = scmp.eq.s32.totalorder %s27, 0
      %p234 = por %p232, %p233
      %s236 = sadd.s32 %s235, 1
      %p239 = scmp.eq.s32.totalorder %s21, 3
      %p240 = scmp.ne.s32.totalorder %s235, %s237
      %p241 = scmp.eq.s32.totalorder %s21, 0
      %p242 = por %p240, %p241
      %p243 = scmp.ne.s32.totalorder %s235, %s237
      %p244 = scmp.eq.s32.totalorder %s26, 3
      %p245 = por %p243, %p244
      %p246 = scmp.ne.s32.totalorder %s237, %s238
      %p247 = scmp.eq.s32.totalorder %s26, 0
      %p248 = por %p246, %p247
      %p249 = scmp.ne.s32.totalorder %s237, %s238
      %p250 = scmp.eq.s32.totalorder %s27, 3
      %p251 = por %p249, %p250
      %p253 = scmp.ne.s32.totalorder %s238, %s252
      %p254 = scmp.eq.s32.totalorder %s27, 0
      %p255 = por %p253, %p254
      %s257 = sadd.s32 %s256, 1
      %p260 = scmp.eq.s32.totalorder %s21, 3
      %p261 = scmp.ne.s32.totalorder %s256, %s258
      %p262 = scmp.eq.s32.totalorder %s21, 0
      %p263 = por %p261, %p262
      %p264 = scmp.ne.s32.totalorder %s256, %s258
      %p265 = scmp.eq.s32.totalorder %s26, 3
      %p266 = por %p264, %p265
      %p267 = scmp.ne.s32.totalorder %s258, %s259
      %p268 = scmp.eq.s32.totalorder %s26, 0
      %p269 = por %p267, %p268
      %p270 = scmp.ne.s32.totalorder %s258, %s259
      %p271 = scmp.eq.s32.totalorder %s27, 3
      %p272 = por %p270, %p271
      %p274 = scmp.ne.s32.totalorder %s259, %s273
      %p275 = scmp.eq.s32.totalorder %s27, 0
      %p276 = por %p274, %p275
      %p277 = scmp.le.s32.totalorder 1, %s21
      %p278 = scmp.lt.s32.totalorder %s21, 5
      %p279 = pnand %p277, %p278
      %p280 = pneg %p279
      // Predicated region
      $region9: #{tpu_custom_call.1} parent=5 // pred_check
        _
      $region10: #{tpu_custom_call.1} parent=5 // pred_check_branch
        %282 = sbr.rel (%p279) target = $region12
      $region11: #{tpu_custom_call.1} parent=5 // pred_region
        %s283 = ssub.s32 %s21, 1
        // Predicated region
        $region13: #{tpu_custom_call.1} parent=11 // pred_check
          %p284 = pneg %p59
        $region14: #{tpu_custom_call.1} parent=11 // pred_check_branch
          %286 = sbr.rel (%p284) target = $region16
        $region15: #{tpu_custom_call.1} parent=11 // pred_region
          %s287 = smul.u32 16, %s31
          %s289 = ssub.s32 1024, 1024
          %290 = vsyncadd [#allocation5], %s289
          %s291 = smul.addr %s287, 64
          %s292 = scalar_lea.hbm %s0, %s291
          %s293 = sshll.u32 [#allocation4], 4
          %s294 = int_to_ptr.vmem [resolvable:$true] %s293
          %299 = dma.hbm_to_vmem [thread:$0]  %s292, 1024, %s294, [#allocation5], 64, 64, 4
        $region16: #{tpu_custom_call.1} parent=11 // pred_fallthru
          _
        // Predicated region
        $region17: #{tpu_custom_call.1} parent=11 // pred_check
          %p300 = pneg %p80
        $region18: #{tpu_custom_call.1} parent=11 // pred_check_branch
          %302 = sbr.rel (%p300) target = $region20
        $region19: #{tpu_custom_call.1} parent=11 // pred_region
          %s304 = ssub.s32 1024, 1024
          %305 = vsyncadd [#allocation8], %s304
          %s306 = sshll.u32 [#allocation7], 4
          %s307 = int_to_ptr.vmem [resolvable:$true] %s306
          %312 = dma.hbm_to_vmem [thread:$0]  %s1, 1024, %s307, [#allocation8], 64, 64, 4
        $region20: #{tpu_custom_call.1} parent=11 // pred_fallthru
          _
        // Predicated region
        $region21: #{tpu_custom_call.1} parent=11 // pred_check
          %p313 = pneg %p101
        $region22: #{tpu_custom_call.1} parent=11 // pred_check_branch
          %315 = sbr.rel (%p313) target = $region24
        $region23: #{tpu_custom_call.1} parent=11 // pred_region
          %s317 = ssub.s32 3072, 3072
          %318 = vsyncadd [#allocation8], %s317
          %s319 = sshll.u32 [#allocation9], 4
          %s320 = int_to_ptr.vmem [resolvable:$true] %s319
          %325 = dma.hbm_to_vmem [thread:$0]  %s2, 3072, %s320, [#allocation8], 64, 64, 4
        $region24: #{tpu_custom_call.1} parent=11 // pred_fallthru
          _
        // Predicated region
        $region25: #{tpu_custom_call.1} parent=11 // pred_check
          %p326 = pneg %p122
        $region26: #{tpu_custom_call.1} parent=11 // pred_check_branch
          %328 = sbr.rel (%p326) target = $region28
        $region27: #{tpu_custom_call.1} parent=11 // pred_region
          _
        $region28: #{tpu_custom_call.1} parent=11 // pred_fallthru
          _
        // Predicated region
        $region29: #{tpu_custom_call.1} parent=11 // pred_check
          %p329 = pneg %p143
        $region30: #{tpu_custom_call.1} parent=11 // pred_check_branch
          %331 = sbr.rel (%p329) target = $region32
        $region31: #{tpu_custom_call.1} parent=11 // pred_region
          %s333 = ssub.s32 3072, 3072
          %334 = vsyncadd [#allocation11], %s333
          %s335 = sshll.u32 [#allocation10], 4
          %s336 = int_to_ptr.vmem [resolvable:$true] %s335
          %341 = dma.hbm_to_vmem [thread:$0]  %s4, 3072, %s336, [#allocation11], 64, 64, 4
        $region32: #{tpu_custom_call.1} parent=11 // pred_fallthru
          _
        // Predicated region
        $region33: #{tpu_custom_call.1} parent=11 // pred_check
          %p342 = pneg %p164
        $region34: #{tpu_custom_call.1} parent=11 // pred_check_branch
          %344 = sbr.rel (%p342) target = $region36
        $region35: #{tpu_custom_call.1} parent=11 // pred_region
          _
        $region36: #{tpu_custom_call.1} parent=11 // pred_fallthru
          _
        // Predicated region
        $region37: #{tpu_custom_call.1} parent=11 // pred_check
          %p345 = pneg %p185
        $region38: #{tpu_custom_call.1} parent=11 // pred_check_branch
          %347 = sbr.rel (%p345) target = $region40
        $region39: #{tpu_custom_call.1} parent=11 // pred_region
          %s349 = ssub.s32 1024, 1024
          %350 = vsyncadd [#allocation11], %s349
          %s351 = sshll.u32 [#allocation12], 4
          %s352 = int_to_ptr.vmem [resolvable:$true] %s351
          %357 = dma.hbm_to_vmem [thread:$0]  %s6, 1024, %s352, [#allocation11], 64, 64, 4
        $region40: #{tpu_custom_call.1} parent=11 // pred_fallthru
          _
        // Predicated region
        $region41: #{tpu_custom_call.1} parent=11 // pred_check
          %p358 = pneg %p206
        $region42: #{tpu_custom_call.1} parent=11 // pred_check_branch
          %360 = sbr.rel (%p358) target = $region44
        $region43: #{tpu_custom_call.1} parent=11 // pred_region
          _
        $region44: #{tpu_custom_call.1} parent=11 // pred_fallthru
          _
        // Predicated region
        $region45: #{tpu_custom_call.1} parent=11 // pred_check
          %p361 = pneg %p227
        $region46: #{tpu_custom_call.1} parent=11 // pred_check_branch
          %363 = sbr.rel (%p361) target = $region48
        $region47: #{tpu_custom_call.1} parent=11 // pred_region
          %s365 = ssub.s32 1024, 1024
          %366 = vsyncadd [#allocation14], %s365
          %s367 = sshll.u32 [#allocation13], 4
          %s368 = int_to_ptr.vmem [resolvable:$true] %s367
          %373 = dma.hbm_to_vmem [thread:$0]  %s8, 1024, %s368, [#allocation14], 64, 64, 4
        $region48: #{tpu_custom_call.1} parent=11 // pred_fallthru
          _
        // Predicated region
        $region49: #{tpu_custom_call.1} parent=11 // pred_check
          %p374 = pneg %p248
        $region50: #{tpu_custom_call.1} parent=11 // pred_check_branch
          %376 = sbr.rel (%p374) target = $region52
        $region51: #{tpu_custom_call.1} parent=11 // pred_region
          _
        $region52: #{tpu_custom_call.1} parent=11 // pred_fallthru
          _
      $region12: #{tpu_custom_call.1} parent=5 // pred_fallthru
        _
      %p377 = scmp.lt.s32.totalorder %s21, 4
      // Predicated region
      $region53: #{tpu_custom_call.1} parent=5 // pred_check
        %p378 = pneg %p377
      $region54: #{tpu_custom_call.1} parent=5 // pred_check_branch
        %380 = sbr.rel (%p378) target = $region56
      $region55: #{tpu_custom_call.1} parent=5 // pred_region
        _
      $region56: #{tpu_custom_call.1} parent=5 // pred_fallthru
        _
      %p381 = scmp.le.s32.totalorder 1, %s21
      %p382 = scmp.lt.s32.totalorder %s21, 5
      %p383 = pnand %p381, %p382
      %p384 = pneg %p383
      // Predicated region
      $region57: #{tpu_custom_call.1} parent=5 // pred_check
        _
      $region58: #{tpu_custom_call.1} parent=5 // pred_check_branch
        %386 = sbr.rel (%p383) target = $region60
      $region59: #{tpu_custom_call.1} parent=5 // pred_region
        %s387 = ssub.s32 %s21, 1
        // Predicated region
        $region61: #{tpu_custom_call.1} parent=59 // pred_check
          %p388 = pneg %p59
        $region62: #{tpu_custom_call.1} parent=59 // pred_check_branch
          %390 = sbr.rel (%p388) target = $region64
        $region63: #{tpu_custom_call.1} parent=59 // pred_region
          %391 = dma.done [#allocation5], 1024
        $region64: #{tpu_custom_call.1} parent=59 // pred_fallthru
          _
        // Predicated region
        $region65: #{tpu_custom_call.1} parent=59 // pred_check
          %p392 = pneg %p80
        $region66: #{tpu_custom_call.1} parent=59 // pred_check_branch
          %394 = sbr.rel (%p392) target = $region68
        $region67: #{tpu_custom_call.1} parent=59 // pred_region
          %395 = dma.done [#allocation8], 1024
        $region68: #{tpu_custom_call.1} parent=59 // pred_fallthru
          _
        // Predicated region
        $region69: #{tpu_custom_call.1} parent=59 // pred_check
          %p396 = pneg %p101
        $region70: #{tpu_custom_call.1} parent=59 // pred_check_branch
          %398 = sbr.rel (%p396) target = $region72
        $region71: #{tpu_custom_call.1} parent=59 // pred_region
          %399 = dma.done [#allocation8], 3072
        $region72: #{tpu_custom_call.1} parent=59 // pred_fallthru
          _
        // Predicated region
        $region73: #{tpu_custom_call.1} parent=59 // pred_check
          %p400 = pneg %p143
        $region74: #{tpu_custom_call.1} parent=59 // pred_check_branch
          %402 = sbr.rel (%p400) target = $region76
        $region75: #{tpu_custom_call.1} parent=59 // pred_region
          %403 = dma.done [#allocation11], 3072
        $region76: #{tpu_custom_call.1} parent=59 // pred_fallthru
          _
        // Predicated region
        $region77: #{tpu_custom_call.1} parent=59 // pred_check
          %p404 = pneg %p185
        $region78: #{tpu_custom_call.1} parent=59 // pred_check_branch
          %406 = sbr.rel (%p404) target = $region80
        $region79: #{tpu_custom_call.1} parent=59 // pred_region
          %407 = dma.done [#allocation11], 1024
        $region80: #{tpu_custom_call.1} parent=59 // pred_fallthru
          _
        // Predicated region
        $region81: #{tpu_custom_call.1} parent=59 // pred_check
          %p408 = pneg %p227
        $region82: #{tpu_custom_call.1} parent=59 // pred_check_branch
          %410 = sbr.rel (%p408) target = $region84
        $region83: #{tpu_custom_call.1} parent=59 // pred_region
          %411 = dma.done [#allocation14], 1024
        $region84: #{tpu_custom_call.1} parent=59 // pred_fallthru
          _
        %p412 = pneg %p59
        %p413 = pneg %p56
        %p414 = pneg %p80
        %p415 = pneg %p77
        %p416 = pneg %p101
        %p417 = pneg %p98
        %p418 = pneg %p122
        %p419 = pneg %p119
        %p420 = pneg %p143
        %p421 = pneg %p140
        %p422 = pneg %p164
        %p423 = pneg %p161
        %p424 = pneg %p185
        %p425 = pneg %p182
        %p426 = pneg %p206
        %p427 = pneg %p203
        %p428 = pneg %p227
        %p429 = pneg %p224
        %p430 = pneg %p248
        %p431 = pneg %p245
        %p432 = pneg %p269
        %p433 = pneg %p266
        %s434 = smul.u32 16, %s31
        %s436 = smul.u32 %s31, 128
        %v437 = vld [vmem:[#allocation4] sm:$0xf]
        %v438 = vld [vmem:[#allocation4 + $0x4] sm:$0xf]
        %v439 = vld [vmem:[#allocation4 + $0x8] sm:$0xf]
        %v440 = vld [vmem:[#allocation4 + $0xc] sm:$0xf]
        %v441 = vld [vmem:[#allocation4 + $0x10] sm:$0xf]
        %v442 = vld [vmem:[#allocation4 + $0x14] sm:$0xf]
        %v443 = vld [vmem:[#allocation4 + $0x18] sm:$0xf]
        %v444 = vld [vmem:[#allocation4 + $0x1c] sm:$0xf]
        %v445 = vld [vmem:[#allocation4 + $0x20] sm:$0xf]
        %v446 = vld [vmem:[#allocation4 + $0x24] sm:$0xf]
        %v447 = vld [vmem:[#allocation4 + $0x28] sm:$0xf]
        %v448 = vld [vmem:[#allocation4 + $0x2c] sm:$0xf]
        %v449 = vld [vmem:[#allocation4 + $0x30] sm:$0xf]
        %v450 = vld [vmem:[#allocation4 + $0x34] sm:$0xf]
        %v451 = vld [vmem:[#allocation4 + $0x38] sm:$0xf]
        %v452 = vld [vmem:[#allocation4 + $0x3c] sm:$0xf]
        %p453 = scmp.ge.s32.totalorder %s30, 2
        %s454 = ssub.s32 %s30, 2
        %s455 = scalar_select %p453, %s454, %s30
        %s456 = sadd.s32 %s455, 1
        %p457 = scmp.eq.s32.totalorder %s30, 0
        // Predicated region
        $region85: #{tpu_custom_call.1} parent=59 // pred_check
          %p458 = pneg %p457
        $region86: #{tpu_custom_call.1} parent=59 // pred_check_branch
          %460 = sbr.rel (%p458) target = $region88
        $region87: #{tpu_custom_call.1} parent=59 // pred_region
          %s461 = sshra.s32 %s436, 3
          %s462 = sand.u32 %s436, 7
          %s463 = smul.addr %s461, 4
          %s464 = scalar_lea.vmem [#allocation7], %s463
          %v465 = vld [vmem:[%s464] sm:$0xf]
          %v466 = vld [vmem:[%s464 + $0x4] sm:$0xf]
          %v467 = vld [vmem:[%s464 + $0x8] sm:$0xf]
          %v468 = vld [vmem:[%s464 + $0xc] sm:$0xf]
          %v469 = vld [vmem:[%s464 + $0x10] sm:$0xf]
          %v470 = vld [vmem:[%s464 + $0x14] sm:$0xf]
          %v471 = vld [vmem:[%s464 + $0x18] sm:$0xf]
          %v472 = vld [vmem:[%s464 + $0x1c] sm:$0xf]
          %v473 = vld [vmem:[%s464 + $0x20] sm:$0xf]
          %v474 = vld [vmem:[%s464 + $0x24] sm:$0xf]
          %v475 = vld [vmem:[%s464 + $0x28] sm:$0xf]
          %v476 = vld [vmem:[%s464 + $0x2c] sm:$0xf]
          %v477 = vld [vmem:[%s464 + $0x30] sm:$0xf]
          %v478 = vld [vmem:[%s464 + $0x34] sm:$0xf]
          %v479 = vld [vmem:[%s464 + $0x38] sm:$0xf]
          %v480 = vld [vmem:[%s464 + $0x3c] sm:$0xf]
          %v497 = vunpack.c.l.b16 %v465
          %v498 = vunpack.c.l.b16 %v466
          %v499 = vunpack.c.l.b16 %v467
          %v500 = vunpack.c.l.b16 %v468
          %v501 = vunpack.c.l.b16 %v469
          %v502 = vunpack.c.l.b16 %v470
          %v503 = vunpack.c.l.b16 %v471
          %v504 = vunpack.c.l.b16 %v472
          %v505 = vunpack.c.l.b16 %v473
          %v506 = vunpack.c.l.b16 %v474
          %v507 = vunpack.c.l.b16 %v475
          %v508 = vunpack.c.l.b16 %v476
          %v509 = vunpack.c.l.b16 %v477
          %v510 = vunpack.c.l.b16 %v478
          %v511 = vunpack.c.l.b16 %v479
          %v512 = vunpack.c.l.b16 %v480
          %v513 = vpack.c.b16 %v498, %v497
          %v514 = vpack.c.b16 %v500, %v499
          %v515 = vpack.c.b16 %v502, %v501
          %v516 = vpack.c.b16 %v504, %v503
          %v517 = vpack.c.b16 %v506, %v505
          %v518 = vpack.c.b16 %v508, %v507
          %v519 = vpack.c.b16 %v510, %v509
          %v520 = vpack.c.b16 %v512, %v511
          %s529 = sshra.s32 %s436, 4
          %s530 = sand.u32 %s436, 15
          %s531 = smul.addr %s529, 8
          %s532 = scalar_lea.vmem [#allocation2], %s531
          %533 = vst [vmem:[%s532] sm:$0xff] %v513
          %534 = vst [vmem:[%s532 + $0x8] sm:$0xff] %v514
          %535 = vst [vmem:[%s532 + $0x10] sm:$0xff] %v515
          %536 = vst [vmem:[%s532 + $0x18] sm:$0xff] %v516
          %537 = vst [vmem:[%s532 + $0x20] sm:$0xff] %v517
          %538 = vst [vmem:[%s532 + $0x28] sm:$0xff] %v518
          %539 = vst [vmem:[%s532 + $0x30] sm:$0xff] %v519
          %540 = vst [vmem:[%s532 + $0x38] sm:$0xff] %v520
          %v541 = vld [vmem:[#allocation7] sm:$0xf]
          %v542 = vld [vmem:[#allocation7 + $0x4] sm:$0xf]
          %v543 = vld [vmem:[#allocation7 + $0x8] sm:$0xf]
          %v544 = vld [vmem:[#allocation7 + $0xc] sm:$0xf]
          %v545 = vld [vmem:[#allocation7 + $0x10] sm:$0xf]
          %v546 = vld [vmem:[#allocation7 + $0x14] sm:$0xf]
          %v547 = vld [vmem:[#allocation7 + $0x18] sm:$0xf]
          %v548 = vld [vmem:[#allocation7 + $0x1c] sm:$0xf]
          %v549 = vld [vmem:[#allocation7 + $0x20] sm:$0xf]
          %v550 = vld [vmem:[#allocation7 + $0x24] sm:$0xf]
          %v551 = vld [vmem:[#allocation7 + $0x28] sm:$0xf]
          %v552 = vld [vmem:[#allocation7 + $0x2c] sm:$0xf]
          %v553 = vld [vmem:[#allocation7 + $0x30] sm:$0xf]
          %v554 = vld [vmem:[#allocation7 + $0x34] sm:$0xf]
          %v555 = vld [vmem:[#allocation7 + $0x38] sm:$0xf]
          %v556 = vld [vmem:[#allocation7 + $0x3c] sm:$0xf]
          %v573 = vunpack.c.l.b16 %v437
          %v574 = vunpack.c.l.b16 %v438
          %v575 = vunpack.c.l.b16 %v439
          %v576 = vunpack.c.l.b16 %v440
          %v577 = vunpack.c.l.b16 %v441
          %v578 = vunpack.c.l.b16 %v442
          %v579 = vunpack.c.l.b16 %v443
          %v580 = vunpack.c.l.b16 %v444
          %v581 = vunpack.c.l.b16 %v445
          %v582 = vunpack.c.l.b16 %v446
          %v583 = vunpack.c.l.b16 %v447
          %v584 = vunpack.c.l.b16 %v448
          %v585 = vunpack.c.l.b16 %v449
          %v586 = vunpack.c.l.b16 %v450
          %v587 = vunpack.c.l.b16 %v451
          %v588 = vunpack.c.l.b16 %v452
          %v589 = vpack.c.b16 %v574, %v573
          %v590 = vpack.c.b16 %v576, %v575
          %v591 = vpack.c.b16 %v578, %v577
          %v592 = vpack.c.b16 %v580, %v579
          %v593 = vpack.c.b16 %v582, %v581
          %v594 = vpack.c.b16 %v584, %v583
          %v595 = vpack.c.b16 %v586, %v585
          %v596 = vpack.c.b16 %v588, %v587
          %v621 = vunpack.c.l.b16 %v541
          %v622 = vunpack.c.l.b16 %v542
          %v623 = vunpack.c.l.b16 %v543
          %v624 = vunpack.c.l.b16 %v544
          %v625 = vunpack.c.l.b16 %v545
          %v626 = vunpack.c.l.b16 %v546
          %v627 = vunpack.c.l.b16 %v547
          %v628 = vunpack.c.l.b16 %v548
          %v629 = vunpack.c.l.b16 %v549
          %v630 = vunpack.c.l.b16 %v550
          %v631 = vunpack.c.l.b16 %v551
          %v632 = vunpack.c.l.b16 %v552
          %v633 = vunpack.c.l.b16 %v553
          %v634 = vunpack.c.l.b16 %v554
          %v635 = vunpack.c.l.b16 %v555
          %v636 = vunpack.c.l.b16 %v556
          %v637 = vpack.c.b16 %v622, %v621
          %v638 = vpack.c.b16 %v624, %v623
          %v639 = vpack.c.b16 %v626, %v625
          %v640 = vpack.c.b16 %v628, %v627
          %v641 = vpack.c.b16 %v630, %v629
          %v642 = vpack.c.b16 %v632, %v631
          %v643 = vpack.c.b16 %v634, %v633
          %v644 = vpack.c.b16 %v636, %v635
          %653 = vmatprep.subr.bf16.mxu0 0
          %654 = vmatpush1.bf16.msra.mxu0 %v637
          %655 = vmatprep.subr.bf16.mxu0 0
          %656 = vmatpush1.bf16.msra.mxu0 %v638
          %657 = vmatprep.subr.bf16.mxu0 0
          %658 = vmatpush1.bf16.msra.mxu0 %v639
          %659 = vmatprep.subr.bf16.mxu0 0
          %660 = vmatpush1.bf16.msra.mxu0 %v640
          %661 = vmatprep.subr.bf16.mxu0 0
          %662 = vmatpush1.bf16.msra.mxu0 %v641
          %663 = vmatprep.subr.bf16.mxu0 0
          %664 = vmatpush1.bf16.msra.mxu0 %v642
          %665 = vmatprep.subr.bf16.mxu0 0
          %666 = vmatpush1.bf16.msra.mxu0 %v643
          %667 = vmatprep.subr.bf16.mxu0 0
          %668 = vmatpush1.bf16.msra.mxu0 %v644
          %669 = vmatprep.subr.bf16.mxu0 0
          %670 = vmatpush1.bf16.msra.mxu0 0
          %671 = vmatprep.subr.bf16.mxu0 0
          %672 = vmatpush1.bf16.msra.mxu0 0
          %673 = vmatprep.subr.bf16.mxu0 0
          %674 = vmatpush1.bf16.msra.mxu0 0
          %675 = vmatprep.subr.bf16.mxu0 0
          %676 = vmatpush1.bf16.msra.mxu0 0
          %677 = vmatprep.subr.bf16.mxu0 0
          %678 = vmatpush1.bf16.msra.mxu0 0
          %679 = vmatprep.subr.bf16.mxu0 0
          %680 = vmatpush1.bf16.msra.mxu0 0
          %681 = vmatprep.subr.bf16.mxu0 0
          %682 = vmatpush1.bf16.msra.mxu0 0
          %683 = vmatprep.subr.bf16.mxu0 0
          %684 = vmatpush1.bf16.msra.mxu0 0
          %685 = vmatprep.mubr.bf16.mxu0 0
          %686 = vmatmul.mubr.bf16.gmra.mrb[0].mxu0 %v589
          %v687 = vpop.f32.mrb[0].mxu0
          %v688 = vadd.f32 0.0, %v687
          %v689 = vpop.f32.mrb[0].mxu0
          %v690 = vpop.f32.mrb[0].mxu0
          %v691 = vadd.f32 0.0, %v690
          %v692 = vpop.f32.mrb[0].mxu0
          %693 = vmatprep.mubr.bf16.mxu0 0
          %694 = vmatmul.mubr.bf16.gmra.mrb[0].mxu0 %v590
          %v695 = vpop.f32.mrb[0].mxu0
          %v696 = vadd.f32 0.0, %v695
          %v697 = vpop.f32.mrb[0].mxu0
          %v698 = vpop.f32.mrb[0].mxu0
          %v699 = vadd.f32 0.0, %v698
          %v700 = vpop.f32.mrb[0].mxu0
          %701 = vmatprep.mubr.bf16.mxu0 0
          %702 = vmatmul.mubr.bf16.gmra.mrb[0].mxu0 %v591
          %v703 = vpop.f32.mrb[0].mxu0
          %v704 = vadd.f32 0.0, %v703
          %v705 = vpop.f32.mrb[0].mxu0
          %v706 = vpop.f32.mrb[0].mxu0
          %v707 = vadd.f32 0.0, %v706
          %v708 = vpop.f32.mrb[0].mxu0
          %709 = vmatprep.mubr.bf16.mxu0 0
          %710 = vmatmul.mubr.bf16.gmra.mrb[0].mxu0 %v592
          %v711 = vpop.f32.mrb[0].mxu0
          %v712 = vadd.f32 0.0, %v711
          %v713 = vpop.f32.mrb[0].mxu0
          %v714 = vpop.f32.mrb[0].mxu0
          %v715 = vadd.f32 0.0, %v714
          %v716 = vpop.f32.mrb[0].mxu0
          %717 = vmatprep.mubr.bf16.mxu0 0
          %718 = vmatmul.mubr.bf16.gmra.mrb[0].mxu0 %v593
          %v719 = vpop.f32.mrb[0].mxu0
          %v720 = vadd.f32 0.0, %v719
          %v721 = vpop.f32.mrb[0].mxu0
          %v722 = vpop.f32.mrb[0].mxu0
          %v723 = vadd.f32 0.0, %v722
          %v724 = vpop.f32.mrb[0].mxu0
          %725 = vmatprep.mubr.bf16.mxu0 0
          %726 = vmatmul.mubr.bf16.gmra.mrb[0].mxu0 %v594
          %v727 = vpop.f32.mrb[0].mxu0
          %v728 = vadd.f32 0.0, %v727
          %v729 = vpop.f32.mrb[0].mxu0
          %v730 = vpop.f32.mrb[0].mxu0
          %v731 = vadd.f32 0.0, %v730
          %v732 = vpop.f32.mrb[0].mxu0
          %733 = vmatprep.mubr.bf16.mxu0 0
          %734 = vmatmul.mubr.bf16.gmra.mrb[0].mxu0 %v595
          %v735 = vpop.f32.mrb[0].mxu0
          %v736 = vadd.f32 0.0, %v735
          %v737 = vpop.f32.mrb[0].mxu0
          %v738 = vpop.f32.mrb[0].mxu0
          %v739 = vadd.f32 0.0, %v738
          %v740 = vpop.f32.mrb[0].mxu0
          %741 = vmatprep.mubr.bf16.mxu0 0
          %742 = vmatmul.mubr.bf16.gmra.mrb[0].mxu0 %v596
          %v743 = vpop.f32.mrb[0].mxu0
          %v744 = vadd.f32 0.0, %v743
          %v745 = vpop.f32.mrb[0].mxu0
          %v746 = vpop.f32.mrb[0].mxu0
          %v747 = vadd.f32 0.0, %v746
          %v748 = vpop.f32.mrb[0].mxu0
          %749 = vdwg.mxu0
          %v750 = vpack.c.bf16 %v691, %v688
          %v751 = vpack.c.bf16 %v699, %v696
          %v752 = vpack.c.bf16 %v707, %v704
          %v753 = vpack.c.bf16 %v715, %v712
          %v754 = vpack.c.bf16 %v723, %v720
          %v755 = vpack.c.bf16 %v731, %v728
          %v756 = vpack.c.bf16 %v739, %v736
          %v757 = vpack.c.bf16 %v747, %v744
          %s758 = sadd.s32 %s436, 128
          %s759 = sshra.s32 %s758, 4
          %s760 = sand.u32 %s758, 15
          %s761 = smul.addr %s759, 8
          %s762 = scalar_lea.vmem [#allocation2], %s761
          %763 = vst [vmem:[%s762] sm:$0xff] %v750
          %764 = vst [vmem:[%s762 + $0x8] sm:$0xff] %v751
          %765 = vst [vmem:[%s762 + $0x10] sm:$0xff] %v752
          %766 = vst [vmem:[%s762 + $0x18] sm:$0xff] %v753
          %767 = vst [vmem:[%s762 + $0x20] sm:$0xff] %v754
          %768 = vst [vmem:[%s762 + $0x28] sm:$0xff] %v755
          %769 = vst [vmem:[%s762 + $0x30] sm:$0xff] %v756
          %770 = vst [vmem:[%s762 + $0x38] sm:$0xff] %v757
          %v771 = vunpack.c.l.bf16 %v465
          %v772 = vunpack.c.l.bf16 %v466
          %v773 = vunpack.c.l.bf16 %v467
          %v774 = vunpack.c.l.bf16 %v468
          %v775 = vunpack.c.l.bf16 %v469
          %v776 = vunpack.c.l.bf16 %v470
          %v777 = vunpack.c.l.bf16 %v471
          %v778 = vunpack.c.l.bf16 %v472
          %v779 = vunpack.c.l.bf16 %v473
          %v780 = vunpack.c.l.bf16 %v474
          %v781 = vunpack.c.l.bf16 %v475
          %v782 = vunpack.c.l.bf16 %v476
          %v783 = vunpack.c.l.bf16 %v477
          %v784 = vunpack.c.l.bf16 %v478
          %v785 = vunpack.c.l.bf16 %v479
          %v786 = vunpack.c.l.bf16 %v480
          %s787 = scalar_lea.vmem [#allocation3], %s436
          %788 = vst [vmem:[%s787] sm:$0xff] %v771
          %789 = vst [vmem:[%s787 + $0x8] sm:$0xff] %v772
          %790 = vst [vmem:[%s787 + $0x10] sm:$0xff] %v773
          %791 = vst [vmem:[%s787 + $0x18] sm:$0xff] %v774
          %792 = vst [vmem:[%s787 + $0x20] sm:$0xff] %v775
          %793 = vst [vmem:[%s787 + $0x28] sm:$0xff] %v776
          %794 = vst [vmem:[%s787 + $0x30] sm:$0xff] %v777
          %795 = vst [vmem:[%s787 + $0x38] sm:$0xff] %v778
          %796 = vst [vmem:[%s787 + $0x40] sm:$0xff] %v779
          %797 = vst [vmem:[%s787 + $0x48] sm:$0xff] %v780
          %798 = vst [vmem:[%s787 + $0x50] sm:$0xff] %v781
          %799 = vst [vmem:[%s787 + $0x58] sm:$0xff] %v782
          %800 = vst [vmem:[%s787 + $0x60] sm:$0xff] %v783
          %801 = vst [vmem:[%s787 + $0x68] sm:$0xff] %v784
          %802 = vst [vmem:[%s787 + $0x70] sm:$0xff] %v785
          %803 = vst [vmem:[%s787 + $0x78] sm:$0xff] %v786
          %s804 = scalar_lea.vmem [#allocation3], %s758
          %805 = vst [vmem:[%s804] sm:$0xff] %v688
          %806 = vst [vmem:[%s804 + $0x8] sm:$0xff] %v691
          %807 = vst [vmem:[%s804 + $0x10] sm:$0xff] %v696
          %808 = vst [vmem:[%s804 + $0x18] sm:$0xff] %v699
          %809 = vst [vmem:[%s804 + $0x20] sm:$0xff] %v704
          %810 = vst [vmem:[%s804 + $0x28] sm:$0xff] %v707
          %811 = vst [vmem:[%s804 + $0x30] sm:$0xff] %v712
          %812 = vst [vmem:[%s804 + $0x38] sm:$0xff] %v715
          %813 = vst [vmem:[%s804 + $0x40] sm:$0xff] %v720
          %814 = vst [vmem:[%s804 + $0x48] sm:$0xff] %v723
          %815 = vst [vmem:[%s804 + $0x50] sm:$0xff] %v728
          %816 = vst [vmem:[%s804 + $0x58] sm:$0xff] %v731
          %817 = vst [vmem:[%s804 + $0x60] sm:$0xff] %v736
          %818 = vst [vmem:[%s804 + $0x68] sm:$0xff] %v739
          %819 = vst [vmem:[%s804 + $0x70] sm:$0xff] %v744
          %820 = vst [vmem:[%s804 + $0x78] sm:$0xff] %v747
        $region88: #{tpu_custom_call.1} parent=59 // pred_fallthru
          _
        %p821 = scmp.ne.s32.totalorder %s30, 0
        // Predicated region
        $region89: #{tpu_custom_call.1} parent=59 // pred_check
          %p822 = pneg %p821
        $region90: #{tpu_custom_call.1} parent=59 // pred_check_branch
          %824 = sbr.rel (%p822) target = $region92
        $region91: #{tpu_custom_call.1} parent=59 // pred_region
          %s825 = smul.u32 %s455, 128
          %s826 = sshra.s32 %s825, 4
          %s827 = sand.u32 %s825, 15
          %s828 = smul.addr %s826, 8
          %s829 = scalar_lea.vmem [#allocation2], %s828
          %v830 = vld [vmem:[%s829] sm:$0xff]
          %v831 = vld [vmem:[%s829 + $0x8] sm:$0xff]
          %v832 = vld [vmem:[%s829 + $0x10] sm:$0xff]
          %v833 = vld [vmem:[%s829 + $0x18] sm:$0xff]
          %v834 = vld [vmem:[%s829 + $0x20] sm:$0xff]
          %v835 = vld [vmem:[%s829 + $0x28] sm:$0xff]
          %v836 = vld [vmem:[%s829 + $0x30] sm:$0xff]
          %v837 = vld [vmem:[%s829 + $0x38] sm:$0xff]
          %v854 = vunpack.c.l.b16 %v437
          %v855 = vunpack.c.l.b16 %v438
          %v856 = vunpack.c.l.b16 %v439
          %v857 = vunpack.c.l.b16 %v440
          %v858 = vunpack.c.l.b16 %v441
          %v859 = vunpack.c.l.b16 %v442
          %v860 = vunpack.c.l.b16 %v443
          %v861 = vunpack.c.l.b16 %v444
          %v862 = vunpack.c.l.b16 %v445
          %v863 = vunpack.c.l.b16 %v446
          %v864 = vunpack.c.l.b16 %v447
          %v865 = vunpack.c.l.b16 %v448
          %v866 = vunpack.c.l.b16 %v449
          %v867 = vunpack.c.l.b16 %v450
          %v868 = vunpack.c.l.b16 %v451
          %v869 = vunpack.c.l.b16 %v452
          %v870 = vpack.c.b16 %v855, %v854
          %v871 = vpack.c.b16 %v857, %v856
          %v872 = vpack.c.b16 %v859, %v858
          %v873 = vpack.c.b16 %v861, %v860
          %v874 = vpack.c.b16 %v863, %v862
          %v875 = vpack.c.b16 %v865, %v864
          %v876 = vpack.c.b16 %v867, %v866
          %v877 = vpack.c.b16 %v869, %v868
          %886 = vmatprep.subr.bf16.mxu0 0
          %887 = vmatpush1.bf16.msra.mxu0 %v830
          %888 = vmatprep.subr.bf16.mxu0 0
          %889 = vmatpush1.bf16.msra.mxu0 %v831
          %890 = vmatprep.subr.bf16.mxu0 0
          %891 = vmatpush1.bf16.msra.mxu0 %v832
          %892 = vmatprep.subr.bf16.mxu0 0
          %893 = vmatpush1.bf16.msra.mxu0 %v833
          %894 = vmatprep.subr.bf16.mxu0 0
          %895 = vmatpush1.bf16.msra.mxu0 %v834
          %896 = vmatprep.subr.bf16.mxu0 0
          %897 = vmatpush1.bf16.msra.mxu0 %v835
          %898 = vmatprep.subr.bf16.mxu0 0
          %899 = vmatpush1.bf16.msra.mxu0 %v836
          %900 = vmatprep.subr.bf16.mxu0 0
          %901 = vmatpush1.bf16.msra.mxu0 %v837
          %902 = vmatprep.subr.bf16.mxu0 0
          %903 = vmatpush1.bf16.msra.mxu0 0
          %904 = vmatprep.subr.bf16.mxu0 0
          %905 = vmatpush1.bf16.msra.mxu0 0
          %906 = vmatprep.subr.bf16.mxu0 0
          %907 = vmatpush1.bf16.msra.mxu0 0
          %908 = vmatprep.subr.bf16.mxu0 0
          %909 = vmatpush1.bf16.msra.mxu0 0
          %910 = vmatprep.subr.bf16.mxu0 0
          %911 = vmatpush1.bf16.msra.mxu0 0
          %912 = vmatprep.subr.bf16.mxu0 0
          %913 = vmatpush1.bf16.msra.mxu0 0
          %914 = vmatprep.subr.bf16.mxu0 0
          %915 = vmatpush1.bf16.msra.mxu0 0
          %916 = vmatprep.subr.bf16.mxu0 0
          %917 = vmatpush1.bf16.msra.mxu0 0
          %918 = vmatprep.mubr.bf16.mxu0 0
          %919 = vmatmul.mubr.bf16.gmra.mrb[0].mxu0 %v870
          %v920 = vpop.f32.mrb[0].mxu0
          %v921 = vadd.f32 0.0, %v920
          %v922 = vpop.f32.mrb[0].mxu0
          %v923 = vpop.f32.mrb[0].mxu0
          %v924 = vadd.f32 0.0, %v923
          %v925 = vpop.f32.mrb[0].mxu0
          %926 = vmatprep.mubr.bf16.mxu0 0
          %927 = vmatmul.mubr.bf16.gmra.mrb[0].mxu0 %v871
          %v928 = vpop.f32.mrb[0].mxu0
          %v929 = vadd.f32 0.0, %v928
          %v930 = vpop.f32.mrb[0].mxu0
          %v931 = vpop.f32.mrb[0].mxu0
          %v932 = vadd.f32 0.0, %v931
          %v933 = vpop.f32.mrb[0].mxu0
          %934 = vmatprep.mubr.bf16.mxu0 0
          %935 = vmatmul.mubr.bf16.gmra.mrb[0].mxu0 %v872
          %v936 = vpop.f32.mrb[0].mxu0
          %v937 = vadd.f32 0.0, %v936
          %v938 = vpop.f32.mrb[0].mxu0
          %v939 = vpop.f32.mrb[0].mxu0
          %v940 = vadd.f32 0.0, %v939
          %v941 = vpop.f32.mrb[0].mxu0
          %942 = vmatprep.mubr.bf16.mxu0 0
          %943 = vmatmul.mubr.bf16.gmra.mrb[0].mxu0 %v873
          %v944 = vpop.f32.mrb[0].mxu0
          %v945 = vadd.f32 0.0, %v944
          %v946 = vpop.f32.mrb[0].mxu0
          %v947 = vpop.f32.mrb[0].mxu0
          %v948 = vadd.f32 0.0, %v947
          %v949 = vpop.f32.mrb[0].mxu0
          %950 = vmatprep.mubr.bf16.mxu0 0
          %951 = vmatmul.mubr.bf16.gmra.mrb[0].mxu0 %v874
          %v952 = vpop.f32.mrb[0].mxu0
          %v953 = vadd.f32 0.0, %v952
          %v954 = vpop.f32.mrb[0].mxu0
          %v955 = vpop.f32.mrb[0].mxu0
          %v956 = vadd.f32 0.0, %v955
          %v957 = vpop.f32.mrb[0].mxu0
          %958 = vmatprep.mubr.bf16.mxu0 0
          %959 = vmatmul.mubr.bf16.gmra.mrb[0].mxu0 %v875
          %v960 = vpop.f32.mrb[0].mxu0
          %v961 = vadd.f32 0.0, %v960
          %v962 = vpop.f32.mrb[0].mxu0
          %v963 = vpop.f32.mrb[0].mxu0
          %v964 = vadd.f32 0.0, %v963
          %v965 = vpop.f32.mrb[0].mxu0
          %966 = vmatprep.mubr.bf16.mxu0 0
          %967 = vmatmul.mubr.bf16.gmra.mrb[0].mxu0 %v876
          %v968 = vpop.f32.mrb[0].mxu0
          %v969 = vadd.f32 0.0, %v968
          %v970 = vpop.f32.mrb[0].mxu0
          %v971 = vpop.f32.mrb[0].mxu0
          %v972 = vadd.f32 0.0, %v971
          %v973 = vpop.f32.mrb[0].mxu0
          %974 = vmatprep.mubr.bf16.mxu0 0
          %975 = vmatmul.mubr.bf16.gmra.mrb[0].mxu0 %v877
          %v976 = vpop.f32.mrb[0].mxu0
          %v977 = vadd.f32 0.0, %v976
          %v978 = vpop.f32.mrb[0].mxu0
          %v979 = vpop.f32.mrb[0].mxu0
          %v980 = vadd.f32 0.0, %v979
          %v981 = vpop.f32.mrb[0].mxu0
          %982 = vdwg.mxu0
          %p983 = scmp.lt.s32.totalorder %s456, 0
          %s984 = ssub.s32 0, %s456
          %s985 = scalar_select %p983, %s984, %s456
          %s986 = sand.u32 %s985, 1
          %s987 = ssub.s32 0, %s986
          %s988 = scalar_select %p983, %s987, %s986
          %p989 = scmp.ne.s32.totalorder %s988, 0
          %p990 = scmp.lt.s32.totalorder %s988, 0
          %p991 = pnand %p990, %p989
          %p992 = pneg %p991
          %s993 = sadd.s32 %s988, 2
          %s994 = scalar_select %p992, %s993, %s988
          %s995 = smul.u32 %s994, 128
          %s996 = sadd.s32 %s995, %s436
          %s997 = scalar_lea.vmem [#allocation3], %s996
          %v998 = vld [vmem:[%s997] sm:$0xff]
          %v999 = vld [vmem:[%s997 + $0x8] sm:$0xff]
          %v1000 = vld [vmem:[%s997 + $0x10] sm:$0xff]
          %v1001 = vld [vmem:[%s997 + $0x18] sm:$0xff]
          %v1002 = vld [vmem:[%s997 + $0x20] sm:$0xff]
          %v1003 = vld [vmem:[%s997 + $0x28] sm:$0xff]
          %v1004 = vld [vmem:[%s997 + $0x30] sm:$0xff]
          %v1005 = vld [vmem:[%s997 + $0x38] sm:$0xff]
          %v1006 = vld [vmem:[%s997 + $0x40] sm:$0xff]
          %v1007 = vld [vmem:[%s997 + $0x48] sm:$0xff]
          %v1008 = vld [vmem:[%s997 + $0x50] sm:$0xff]
          %v1009 = vld [vmem:[%s997 + $0x58] sm:$0xff]
          %v1010 = vld [vmem:[%s997 + $0x60] sm:$0xff]
          %v1011 = vld [vmem:[%s997 + $0x68] sm:$0xff]
          %v1012 = vld [vmem:[%s997 + $0x70] sm:$0xff]
          %v1013 = vld [vmem:[%s997 + $0x78] sm:$0xff]
          %p1014 = scmp.eq.s32.totalorder %s30, 2
          %v1015 = vmul.f32 %v921, 2.0
          %v1016 = vmul.f32 %v924, 2.0
          %v1017 = vmul.f32 %v929, 2.0
          %v1018 = vmul.f32 %v932, 2.0
          %v1019 = vmul.f32 %v937, 2.0
          %v1020 = vmul.f32 %v940, 2.0
          %v1021 = vmul.f32 %v945, 2.0
          %v1022 = vmul.f32 %v948, 2.0
          %v1023 = vmul.f32 %v953, 2.0
          %v1024 = vmul.f32 %v956, 2.0
          %v1025 = vmul.f32 %v961, 2.0
          %v1026 = vmul.f32 %v964, 2.0
          %v1027 = vmul.f32 %v969, 2.0
          %v1028 = vmul.f32 %v972, 2.0
          %v1029 = vmul.f32 %v977, 2.0
          %v1030 = vmul.f32 %v980, 2.0
          %v1031 = vsub.f32 %v1015, %v998
          %v1032 = vsub.f32 %v1016, %v999
          %v1033 = vsub.f32 %v1017, %v1000
          %v1034 = vsub.f32 %v1018, %v1001
          %v1035 = vsub.f32 %v1019, %v1002
          %v1036 = vsub.f32 %v1020, %v1003
          %v1037 = vsub.f32 %v1021, %v1004
          %v1038 = vsub.f32 %v1022, %v1005
          %v1039 = vsub.f32 %v1023, %v1006
          %v1040 = vsub.f32 %v1024, %v1007
          %v1041 = vsub.f32 %v1025, %v1008
          %v1042 = vsub.f32 %v1026, %v1009
          %v1043 = vsub.f32 %v1027, %v1010
          %v1044 = vsub.f32 %v1028, %v1011
          %v1045 = vsub.f32 %v1029, %v1012
          %v1046 = vsub.f32 %v1030, %v1013
          %s1047 = scalar_select %p1014, 1, 0
          %v1048 = vstv %s1047
          %vm1049 = vcmp.eq.s32.totalorder %v1048, 1
          %v1050 = vsel %vm1049, %v921, %v1031
          %v1051 = vsel %vm1049, %v924, %v1032
          %v1052 = vsel %vm1049, %v929, %v1033
          %v1053 = vsel %vm1049, %v932, %v1034
          %v1054 = vsel %vm1049, %v937, %v1035
          %v1055 = vsel %vm1049, %v940, %v1036
          %v1056 = vsel %vm1049, %v945, %v1037
          %v1057 = vsel %vm1049, %v948, %v1038
          %v1058 = vsel %vm1049, %v953, %v1039
          %v1059 = vsel %vm1049, %v956, %v1040
          %v1060 = vsel %vm1049, %v961, %v1041
          %v1061 = vsel %vm1049, %v964, %v1042
          %v1062 = vsel %vm1049, %v969, %v1043
          %v1063 = vsel %vm1049, %v972, %v1044
          %v1064 = vsel %vm1049, %v977, %v1045
          %v1065 = vsel %vm1049, %v980, %v1046
          %1066 = vst [vmem:[%s997] sm:$0xff] %v1050
          %1067 = vst [vmem:[%s997 + $0x8] sm:$0xff] %v1051
          %1068 = vst [vmem:[%s997 + $0x10] sm:$0xff] %v1052
          %1069 = vst [vmem:[%s997 + $0x18] sm:$0xff] %v1053
          %1070 = vst [vmem:[%s997 + $0x20] sm:$0xff] %v1054
          %1071 = vst [vmem:[%s997 + $0x28] sm:$0xff] %v1055
          %1072 = vst [vmem:[%s997 + $0x30] sm:$0xff] %v1056
          %1073 = vst [vmem:[%s997 + $0x38] sm:$0xff] %v1057
          %1074 = vst [vmem:[%s997 + $0x40] sm:$0xff] %v1058
          %1075 = vst [vmem:[%s997 + $0x48] sm:$0xff] %v1059
          %1076 = vst [vmem:[%s997 + $0x50] sm:$0xff] %v1060
          %1077 = vst [vmem:[%s997 + $0x58] sm:$0xff] %v1061
          %1078 = vst [vmem:[%s997 + $0x60] sm:$0xff] %v1062
          %1079 = vst [vmem:[%s997 + $0x68] sm:$0xff] %v1063
          %1080 = vst [vmem:[%s997 + $0x70] sm:$0xff] %v1064
          %1081 = vst [vmem:[%s997 + $0x78] sm:$0xff] %v1065
          %v1082 = vpack.c.bf16 %v1051, %v1050
          %v1083 = vpack.c.bf16 %v1053, %v1052
          %v1084 = vpack.c.bf16 %v1055, %v1054
          %v1085 = vpack.c.bf16 %v1057, %v1056
          %v1086 = vpack.c.bf16 %v1059, %v1058
          %v1087 = vpack.c.bf16 %v1061, %v1060
          %v1088 = vpack.c.bf16 %v1063, %v1062
          %v1089 = vpack.c.bf16 %v1065, %v1064
          %s1090 = smul.u32 %s456, 128
          %s1091 = sadd.s32 %s1090, %s436
          %s1092 = sshra.s32 %s1091, 4
          %s1093 = sand.u32 %s1091, 15
          %s1094 = smul.addr %s1092, 8
          %s1095 = scalar_lea.vmem [#allocation2], %s1094
          %1096 = vst [vmem:[%s1095] sm:$0xff] %v1082
          %1097 = vst [vmem:[%s1095 + $0x8] sm:$0xff] %v1083
          %1098 = vst [vmem:[%s1095 + $0x10] sm:$0xff] %v1084
          %1099 = vst [vmem:[%s1095 + $0x18] sm:$0xff] %v1085
          %1100 = vst [vmem:[%s1095 + $0x20] sm:$0xff] %v1086
          %1101 = vst [vmem:[%s1095 + $0x28] sm:$0xff] %v1087
          %1102 = vst [vmem:[%s1095 + $0x30] sm:$0xff] %v1088
          %1103 = vst [vmem:[%s1095 + $0x38] sm:$0xff] %v1089
        $region92: #{tpu_custom_call.1} parent=59 // pred_fallthru
          _
        %p1104 = scmp.eq.s32.totalorder %s30, 1
        // Predicated region
        $region93: #{tpu_custom_call.1} parent=59 // pred_check
          %p1105 = pneg %p1104
        $region94: #{tpu_custom_call.1} parent=59 // pred_check_branch
          %1107 = sbr.rel (%p1105) target = $region96
        $region95: #{tpu_custom_call.1} parent=59 // pred_region
          %s1108 = sshra.s32 %s436, 4
          %s1109 = sand.u32 %s436, 15
          %s1110 = smul.addr %s1108, 8
          %s1111 = scalar_lea.vmem [#allocation2], %s1110
          %v1112 = vld [vmem:[%s1111] sm:$0xff]
          %v1113 = vld [vmem:[%s1111 + $0x8] sm:$0xff]
          %v1114 = vld [vmem:[%s1111 + $0x10] sm:$0xff]
          %v1115 = vld [vmem:[%s1111 + $0x18] sm:$0xff]
          %v1116 = vld [vmem:[%s1111 + $0x20] sm:$0xff]
          %v1117 = vld [vmem:[%s1111 + $0x28] sm:$0xff]
          %v1118 = vld [vmem:[%s1111 + $0x30] sm:$0xff]
          %v1119 = vld [vmem:[%s1111 + $0x38] sm:$0xff]
          %s1120 = sadd.s32 %s436, 128
          %s1121 = sshra.s32 %s1120, 4
          %s1122 = sand.u32 %s1120, 15
          %s1123 = smul.addr %s1121, 8
          %s1124 = scalar_lea.vmem [#allocation2], %s1123
          %v1125 = vld [vmem:[%s1124] sm:$0xff]
          %v1126 = vld [vmem:[%s1124 + $0x8] sm:$0xff]
          %v1127 = vld [vmem:[%s1124 + $0x10] sm:$0xff]
          %v1128 = vld [vmem:[%s1124 + $0x18] sm:$0xff]
          %v1129 = vld [vmem:[%s1124 + $0x20] sm:$0xff]
          %v1130 = vld [vmem:[%s1124 + $0x28] sm:$0xff]
          %v1131 = vld [vmem:[%s1124 + $0x30] sm:$0xff]
          %v1132 = vld [vmem:[%s1124 + $0x38] sm:$0xff]
          %s1133 = sadd.s32 %s436, 256
          %s1134 = sshra.s32 %s1133, 4
          %s1135 = sand.u32 %s1133, 15
          %s1136 = smul.addr %s1134, 8
          %s1137 = scalar_lea.vmem [#allocation2], %s1136
          %v1138 = vld [vmem:[%s1137] sm:$0xff]
          %v1139 = vld [vmem:[%s1137 + $0x8] sm:$0xff]
          %v1140 = vld [vmem:[%s1137 + $0x10] sm:$0xff]
          %v1141 = vld [vmem:[%s1137 + $0x18] sm:$0xff]
          %v1142 = vld [vmem:[%s1137 + $0x20] sm:$0xff]
          %v1143 = vld [vmem:[%s1137 + $0x28] sm:$0xff]
          %v1144 = vld [vmem:[%s1137 + $0x30] sm:$0xff]
          %v1145 = vld [vmem:[%s1137 + $0x38] sm:$0xff]
          %v1146 = vld [vmem:[#allocation9] sm:$0xf]
          %v1147 = vld [vmem:[#allocation9 + $0x4] sm:$0xf]
          %v1148 = vld [vmem:[#allocation9 + $0x8] sm:$0xf]
          %v1149 = vld [vmem:[#allocation9 + $0xc] sm:$0xf]
          %v1150 = vld [vmem:[#allocation9 + $0x10] sm:$0xf]
          %v1151 = vld [vmem:[#allocation9 + $0x14] sm:$0xf]
          %v1152 = vld [vmem:[#allocation9 + $0x18] sm:$0xf]
          %v1153 = vld [vmem:[#allocation9 + $0x1c] sm:$0xf]
          %v1154 = vld [vmem:[#allocation9 + $0x20] sm:$0xf]
          %v1155 = vld [vmem:[#allocation9 + $0x24] sm:$0xf]
          %v1156 = vld [vmem:[#allocation9 + $0x28] sm:$0xf]
          %v1157 = vld [vmem:[#allocation9 + $0x2c] sm:$0xf]
          %v1158 = vld [vmem:[#allocation9 + $0x30] sm:$0xf]
          %v1159 = vld [vmem:[#allocation9 + $0x34] sm:$0xf]
          %v1160 = vld [vmem:[#allocation9 + $0x38] sm:$0xf]
          %v1161 = vld [vmem:[#allocation9 + $0x3c] sm:$0xf]
          %v1162 = vld [vmem:[#allocation9 + $0x40] sm:$0xf]
          %v1163 = vld [vmem:[#allocation9 + $0x44] sm:$0xf]
          %v1164 = vld [vmem:[#allocation9 + $0x48] sm:$0xf]
          %v1165 = vld [vmem:[#allocation9 + $0x4c] sm:$0xf]
          %v1166 = vld [vmem:[#allocation9 + $0x50] sm:$0xf]
          %v1167 = vld [vmem:[#allocation9 + $0x54] sm:$0xf]
          %v1168 = vld [vmem:[#allocation9 + $0x58] sm:$0xf]
          %v1169 = vld [vmem:[#allocation9 + $0x5c] sm:$0xf]
          %v1170 = vld [vmem:[#allocation9 + $0x60] sm:$0xf]
          %v1171 = vld [vmem:[#allocation9 + $0x64] sm:$0xf]
          %v1172 = vld [vmem:[#allocation9 + $0x68] sm:$0xf]
          %v1173 = vld [vmem:[#allocation9 + $0x6c] sm:$0xf]
          %v1174 = vld [vmem:[#allocation9 + $0x70] sm:$0xf]
          %v1175 = vld [vmem:[#allocation9 + $0x74] sm:$0xf]
          %v1176 = vld [vmem:[#allocation9 + $0x78] sm:$0xf]
          %v1177 = vld [vmem:[#allocation9 + $0x7c] sm:$0xf]
          %v1178 = vld [vmem:[#allocation9 + $0x80] sm:$0xf]
          %v1179 = vld [vmem:[#allocation9 + $0x84] sm:$0xf]
          %v1180 = vld [vmem:[#allocation9 + $0x88] sm:$0xf]
          %v1181 = vld [vmem:[#allocation9 + $0x8c] sm:$0xf]
          %v1182 = vld [vmem:[#allocation9 + $0x90] sm:$0xf]
          %v1183 = vld [vmem:[#allocation9 + $0x94] sm:$0xf]
          %v1184 = vld [vmem:[#allocation9 + $0x98] sm:$0xf]
          %v1185 = vld [vmem:[#allocation9 + $0x9c] sm:$0xf]
          %v1186 = vld [vmem:[#allocation9 + $0xa0] sm:$0xf]
          %v1187 = vld [vmem:[#allocation9 + $0xa4] sm:$0xf]
          %v1188 = vld [vmem:[#allocation9 + $0xa8] sm:$0xf]
          %v1189 = vld [vmem:[#allocation9 + $0xac] sm:$0xf]
          %v1190 = vld [vmem:[#allocation9 + $0xb0] sm:$0xf]
          %v1191 = vld [vmem:[#allocation9 + $0xb4] sm:$0xf]
          %v1192 = vld [vmem:[#allocation9 + $0xb8] sm:$0xf]
          %v1193 = vld [vmem:[#allocation9 + $0xbc] sm:$0xf]
          %v1194 = vld [vmem:[%s3] sm:$0x1]
          %v1196 = vlaneseq
          %v1197 = vshrl.u32 %v1196, 7
          %v1198 = vsub.s32 0, %v1197
          %v1199 = vrot.slane %v1194, %v1198
          %v1249 = vunpack.c.l.b16 %v1146
          %v1250 = vunpack.c.l.b16 %v1147
          %v1251 = vunpack.c.l.b16 %v1148
          %v1252 = vunpack.c.l.b16 %v1149
          %v1253 = vunpack.c.l.b16 %v1150
          %v1254 = vunpack.c.l.b16 %v1151
          %v1255 = vunpack.c.l.b16 %v1152
          %v1256 = vunpack.c.l.b16 %v1153
          %v1257 = vunpack.c.l.b16 %v1154
          %v1258 = vunpack.c.l.b16 %v1155
          %v1259 = vunpack.c.l.b16 %v1156
          %v1260 = vunpack.c.l.b16 %v1157
          %v1261 = vunpack.c.l.b16 %v1158
          %v1262 = vunpack.c.l.b16 %v1159
          %v1263 = vunpack.c.l.b16 %v1160
          %v1264 = vunpack.c.l.b16 %v1161
          %v1265 = vunpack.c.l.b16 %v1162
          %v1266 = vunpack.c.l.b16 %v1163
          %v1267 = vunpack.c.l.b16 %v1164
          %v1268 = vunpack.c.l.b16 %v1165
          %v1269 = vunpack.c.l.b16 %v1166
          %v1270 = vunpack.c.l.b16 %v1167
          %v1271 = vunpack.c.l.b16 %v1168
          %v1272 = vunpack.c.l.b16 %v1169
          %v1273 = vunpack.c.l.b16 %v1170
          %v1274 = vunpack.c.l.b16 %v1171
          %v1275 = vunpack.c.l.b16 %v1172
          %v1276 = vunpack.c.l.b16 %v1173
          %v1277 = vunpack.c.l.b16 %v1174
          %v1278 = vunpack.c.l.b16 %v1175
          %v1279 = vunpack.c.l.b16 %v1176
          %v1280 = vunpack.c.l.b16 %v1177
          %v1281 = vunpack.c.l.b16 %v1178
          %v1282 = vunpack.c.l.b16 %v1179
          %v1283 = vunpack.c.l.b16 %v1180
          %v1284 = vunpack.c.l.b16 %v1181
          %v1285 = vunpack.c.l.b16 %v1182
          %v1286 = vunpack.c.l.b16 %v1183
          %v1287 = vunpack.c.l.b16 %v1184
          %v1288 = vunpack.c.l.b16 %v1185
          %v1289 = vunpack.c.l.b16 %v1186
          %v1290 = vunpack.c.l.b16 %v1187
          %v1291 = vunpack.c.l.b16 %v1188
          %v1292 = vunpack.c.l.b16 %v1189
          %v1293 = vunpack.c.l.b16 %v1190
          %v1294 = vunpack.c.l.b16 %v1191
          %v1295 = vunpack.c.l.b16 %v1192
          %v1296 = vunpack.c.l.b16 %v1193
          %v1297 = vpack.c.b16 %v1250, %v1249
          %v1298 = vpack.c.b16 %v1252, %v1251
          %v1299 = vpack.c.b16 %v1254, %v1253
          %v1300 = vpack.c.b16 %v1256, %v1255
          %v1301 = vpack.c.b16 %v1258, %v1257
          %v1302 = vpack.c.b16 %v1260, %v1259
          %v1303 = vpack.c.b16 %v1262, %v1261
          %v1304 = vpack.c.b16 %v1264, %v1263
          %v1305 = vpack.c.b16 %v1266, %v1265
          %v1306 = vpack.c.b16 %v1268, %v1267
          %v1307 = vpack.c.b16 %v1270, %v1269
          %v1308 = vpack.c.b16 %v1272, %v1271
          %v1309 = vpack.c.b16 %v1274, %v1273
          %v1310 = vpack.c.b16 %v1276, %v1275
          %v1311 = vpack.c.b16 %v1278, %v1277
          %v1312 = vpack.c.b16 %v1280, %v1279
          %v1313 = vpack.c.b16 %v1282, %v1281
          %v1314 = vpack.c.b16 %v1284, %v1283
          %v1315 = vpack.c.b16 %v1286, %v1285
          %v1316 = vpack.c.b16 %v1288, %v1287
          %v1317 = vpack.c.b16 %v1290, %v1289
          %v1318 = vpack.c.b16 %v1292, %v1291
          %v1319 = vpack.c.b16 %v1294, %v1293
          %v1320 = vpack.c.b16 %v1296, %v1295
          %1345 = vmatprep.subr.bf16.mxu0 0
          %1346 = vmatpush1.bf16.msra.mxu0 %v1297
          %1347 = vmatprep.subr.bf16.mxu0 0
          %1348 = vmatpush1.bf16.msra.mxu0 %v1298
          %1349 = vmatprep.subr.bf16.mxu0 0
          %1350 = vmatpush1.bf16.msra.mxu0 %v1299
          %1351 = vmatprep.subr.bf16.mxu0 0
          %1352 = vmatpush1.bf16.msra.mxu0 %v1300
          %1353 = vmatprep.subr.bf16.mxu0 0
          %1354 = vmatpush1.bf16.msra.mxu0 %v1301
          %1355 = vmatprep.subr.bf16.mxu0 0
          %1356 = vmatpush1.bf16.msra.mxu0 %v1302
          %1357 = vmatprep.subr.bf16.mxu0 0
          %1358 = vmatpush1.bf16.msra.mxu0 %v1303
          %1359 = vmatprep.subr.bf16.mxu0 0
          %1360 = vmatpush1.bf16.msra.mxu0 %v1304
          %1361 = vmatprep.subr.bf16.mxu0 0
          %1362 = vmatpush1.bf16.msra.mxu0 %v1305
          %1363 = vmatprep.subr.bf16.mxu0 0
          %1364 = vmatpush1.bf16.msra.mxu0 %v1306
          %1365 = vmatprep.subr.bf16.mxu0 0
          %1366 = vmatpush1.bf16.msra.mxu0 %v1307
          %1367 = vmatprep.subr.bf16.mxu0 0
          %1368 = vmatpush1.bf16.msra.mxu0 %v1308
          %1369 = vmatprep.subr.bf16.mxu0 0
          %1370 = vmatpush1.bf16.msra.mxu0 %v1309
          %1371 = vmatprep.subr.bf16.mxu0 0
          %1372 = vmatpush1.bf16.msra.mxu0 %v1310
          %1373 = vmatprep.subr.bf16.mxu0 0
          %1374 = vmatpush1.bf16.msra.mxu0 %v1311
          %1375 = vmatprep.subr.bf16.mxu0 0
          %1376 = vmatpush1.bf16.msra.mxu0 %v1312
          %1377 = vmatprep.mubr.bf16.mxu0 %v1125
          %1378 = vmatmul.mubr.bf16.gmra.mrb[0].mxu0 %v1112
          %v1379 = vpop.f32.mrb[0].mxu0
          %v1380 = vadd.f32 %v1199, %v1379
          %v1381 = vpop.f32.mrb[0].mxu0
          %v1382 = vpop.f32.mrb[0].mxu0
          %v1383 = vadd.f32 %v1199, %v1382
          %v1384 = vpop.f32.mrb[0].mxu0
          %1385 = vmatprep.mubr.bf16.mxu0 %v1126
          %1386 = vmatmul.mubr.bf16.gmra.mrb[0].mxu0 %v1113
          %v1387 = vpop.f32.mrb[0].mxu0
          %v1388 = vadd.f32 %v1199, %v1387
          %v1389 = vpop.f32.mrb[0].mxu0
          %v1390 = vpop.f32.mrb[0].mxu0
          %v1391 = vadd.f32 %v1199, %v1390
          %v1392 = vpop.f32.mrb[0].mxu0
          %1393 = vmatprep.mubr.bf16.mxu0 %v1127
          %1394 = vmatmul.mubr.bf16.gmra.mrb[0].mxu0 %v1114
          %v1395 = vpop.f32.mrb[0].mxu0
          %v1396 = vadd.f32 %v1199, %v1395
          %v1397 = vpop.f32.mrb[0].mxu0
          %v1398 = vpop.f32.mrb[0].mxu0
          %v1399 = vadd.f32 %v1199, %v1398
          %v1400 = vpop.f32.mrb[0].mxu0
          %1401 = vmatprep.mubr.bf16.mxu0 %v1128
          %1402 = vmatmul.mubr.bf16.gmra.mrb[0].mxu0 %v1115
          %v1403 = vpop.f32.mrb[0].mxu0
          %v1404 = vadd.f32 %v1199, %v1403
          %v1405 = vpop.f32.mrb[0].mxu0
          %v1406 = vpop.f32.mrb[0].mxu0
          %v1407 = vadd.f32 %v1199, %v1406
          %v1408 = vpop.f32.mrb[0].mxu0
          %1409 = vmatprep.mubr.bf16.mxu0 %v1129
          %1410 = vmatmul.mubr.bf16.gmra.mrb[0].mxu0 %v1116
          %v1411 = vpop.f32.mrb[0].mxu0
          %v1412 = vadd.f32 %v1199, %v1411
          %v1413 = vpop.f32.mrb[0].mxu0
          %v1414 = vpop.f32.mrb[0].mxu0
          %v1415 = vadd.f32 %v1199, %v1414
          %v1416 = vpop.f32.mrb[0].mxu0
          %1417 = vmatprep.mubr.bf16.mxu0 %v1130
          %1418 = vmatmul.mubr.bf16.gmra.mrb[0].mxu0 %v1117
          %v1419 = vpop.f32.mrb[0].mxu0
          %v1420 = vadd.f32 %v1199, %v1419
          %v1421 = vpop.f32.mrb[0].mxu0
          %v1422 = vpop.f32.mrb[0].mxu0
          %v1423 = vadd.f32 %v1199, %v1422
          %v1424 = vpop.f32.mrb[0].mxu0
          %1425 = vmatprep.mubr.bf16.mxu0 %v1131
          %1426 = vmatmul.mubr.bf16.gmra.mrb[0].mxu0 %v1118
          %v1427 = vpop.f32.mrb[0].mxu0
          %v1428 = vadd.f32 %v1199, %v1427
          %v1429 = vpop.f32.mrb[0].mxu0
          %v1430 = vpop.f32.mrb[0].mxu0
          %v1431 = vadd.f32 %v1199, %v1430
          %v1432 = vpop.f32.mrb[0].mxu0
          %1433 = vmatprep.mubr.bf16.mxu0 %v1132
          %1434 = vmatmul.mubr.bf16.gmra.mrb[0].mxu0 %v1119
          %v1435 = vpop.f32.mrb[0].mxu0
          %v1436 = vadd.f32 %v1199, %v1435
          %v1437 = vpop.f32.mrb[0].mxu0
          %v1438 = vpop.f32.mrb[0].mxu0
          %v1439 = vadd.f32 %v1199, %v1438
          %v1440 = vpop.f32.mrb[0].mxu0
          %1441 = vdwg.mxu0
          %1442 = vmatprep.subr.bf16.mxu0 0
          %1443 = vmatpush1.bf16.msra.mxu0 %v1313
          %1444 = vmatprep.subr.bf16.mxu0 0
          %1445 = vmatpush1.bf16.msra.mxu0 %v1314
          %1446 = vmatprep.subr.bf16.mxu0 0
          %1447 = vmatpush1.bf16.msra.mxu0 %v1315
          %1448 = vmatprep.subr.bf16.mxu0 0
          %1449 = vmatpush1.bf16.msra.mxu0 %v1316
          %1450 = vmatprep.subr.bf16.mxu0 0
          %1451 = vmatpush1.bf16.msra.mxu0 %v1317
          %1452 = vmatprep.subr.bf16.mxu0 0
          %1453 = vmatpush1.bf16.msra.mxu0 %v1318
          %1454 = vmatprep.subr.bf16.mxu0 0
          %1455 = vmatpush1.bf16.msra.mxu0 %v1319
          %1456 = vmatprep.subr.bf16.mxu0 0
          %1457 = vmatpush1.bf16.msra.mxu0 %v1320
          %1458 = vmatprep.subr.bf16.mxu0 0
          %1459 = vmatpush1.bf16.msra.mxu0 0
          %1460 = vmatprep.subr.bf16.mxu0 0
          %1461 = vmatpush1.bf16.msra.mxu0 0
          %1462 = vmatprep.subr.bf16.mxu0 0
          %1463 = vmatpush1.bf16.msra.mxu0 0
          %1464 = vmatprep.subr.bf16.mxu0 0
          %1465 = vmatpush1.bf16.msra.mxu0 0
          %1466 = vmatprep.subr.bf16.mxu0 0
          %1467 = vmatpush1.bf16.msra.mxu0 0
          %1468 = vmatprep.subr.bf16.mxu0 0
          %1469 = vmatpush1.bf16.msra.mxu0 0
          %1470 = vmatprep.subr.bf16.mxu0 0
          %1471 = vmatpush1.bf16.msra.mxu0 0
          %1472 = vmatprep.subr.bf16.mxu0 0
          %1473 = vmatpush1.bf16.msra.mxu0 0
          %1474 = vmatprep.mubr.bf16.mxu0 0
          %1475 = vmatmul.mubr.bf16.gmra.mrb[0].mxu0 %v1138
          %v1476 = vpop.f32.mrb[0].mxu0
          %v1477 = vadd.f32 %v1380, %v1476
          %v1478 = vpop.f32.mrb[0].mxu0
          %v1479 = vpop.f32.mrb[0].mxu0
          %v1480 = vadd.f32 %v1383, %v1479
          %v1481 = vpop.f32.mrb[0].mxu0
          %1482 = vmatprep.mubr.bf16.mxu0 0
          %1483 = vmatmul.mubr.bf16.gmra.mrb[0].mxu0 %v1139
          %v1484 = vpop.f32.mrb[0].mxu0
          %v1485 = vadd.f32 %v1388, %v1484
          %v1486 = vpop.f32.mrb[0].mxu0
          %v1487 = vpop.f32.mrb[0].mxu0
          %v1488 = vadd.f32 %v1391, %v1487
          %v1489 = vpop.f32.mrb[0].mxu0
          %1490 = vmatprep.mubr.bf16.mxu0 0
          %1491 = vmatmul.mubr.bf16.gmra.mrb[0].mxu0 %v1140
          %v1492 = vpop.f32.mrb[0].mxu0
          %v1493 = vadd.f32 %v1396, %v1492
          %v1494 = vpop.f32.mrb[0].mxu0
          %v1495 = vpop.f32.mrb[0].mxu0
          %v1496 = vadd.f32 %v1399, %v1495
          %v1497 = vpop.f32.mrb[0].mxu0
          %1498 = vmatprep.mubr.bf16.mxu0 0
          %1499 = vmatmul.mubr.bf16.gmra.mrb[0].mxu0 %v1141
          %v1500 = vpop.f32.mrb[0].mxu0
          %v1501 = vadd.f32 %v1404, %v1500
          %v1502 = vpop.f32.mrb[0].mxu0
          %v1503 = vpop.f32.mrb[0].mxu0
          %v1504 = vadd.f32 %v1407, %v1503
          %v1505 = vpop.f32.mrb[0].mxu0
          %1506 = vmatprep.mubr.bf16.mxu0 0
          %1507 = vmatmul.mubr.bf16.gmra.mrb[0].mxu0 %v1142
          %v1508 = vpop.f32.mrb[0].mxu0
          %v1509 = vadd.f32 %v1412, %v1508
          %v1510 = vpop.f32.mrb[0].mxu0
          %v1511 = vpop.f32.mrb[0].mxu0
          %v1512 = vadd.f32 %v1415, %v1511
          %v1513 = vpop.f32.mrb[0].mxu0
          %1514 = vmatprep.mubr.bf16.mxu0 0
          %1515 = vmatmul.mubr.bf16.gmra.mrb[0].mxu0 %v1143
          %v1516 = vpop.f32.mrb[0].mxu0
          %v1517 = vadd.f32 %v1420, %v1516
          %v1518 = vpop.f32.mrb[0].mxu0
          %v1519 = vpop.f32.mrb[0].mxu0
          %v1520 = vadd.f32 %v1423, %v1519
          %v1521 = vpop.f32.mrb[0].mxu0
          %1522 = vmatprep.mubr.bf16.mxu0 0
          %1523 = vmatmul.mubr.bf16.gmra.mrb[0].mxu0 %v1144
          %v1524 = vpop.f32.mrb[0].mxu0
          %v1525 = vadd.f32 %v1428, %v1524
          %v1526 = vpop.f32.mrb[0].mxu0
          %v1527 = vpop.f32.mrb[0].mxu0
          %v1528 = vadd.f32 %v1431, %v1527
          %v1529 = vpop.f32.mrb[0].mxu0
          %1530 = vmatprep.mubr.bf16.mxu0 0
          %1531 = vmatmul.mubr.bf16.gmra.mrb[0].mxu0 %v1145
          %v1532 = vpop.f32.mrb[0].mxu0
          %v1533 = vadd.f32 %v1436, %v1532
          %v1534 = vpop.f32.mrb[0].mxu0
          %v1535 = vpop.f32.mrb[0].mxu0
          %v1536 = vadd.f32 %v1439, %v1535
          %v1537 = vpop.f32.mrb[0].mxu0
          %1538 = vdwg.mxu0
          %v1539 = vmax.f32 %v1477, 0.0
          %v1540 = vmax.f32 %v1480, 0.0
          %v1541 = vmax.f32 %v1485, 0.0
          %v1542 = vmax.f32 %v1488, 0.0
          %v1543 = vmax.f32 %v1493, 0.0
          %v1544 = vmax.f32 %v1496, 0.0
          %v1545 = vmax.f32 %v1501, 0.0
          %v1546 = vmax.f32 %v1504, 0.0
          %v1547 = vmax.f32 %v1509, 0.0
          %v1548 = vmax.f32 %v1512, 0.0
          %v1549 = vmax.f32 %v1517, 0.0
          %v1550 = vmax.f32 %v1520, 0.0
          %v1551 = vmax.f32 %v1525, 0.0
          %v1552 = vmax.f32 %v1528, 0.0
          %v1553 = vmax.f32 %v1533, 0.0
          %v1554 = vmax.f32 %v1536, 0.0
          %v1555 = vpack.c.bf16 %v1540, %v1539
          %v1556 = vpack.c.bf16 %v1542, %v1541
          %v1557 = vpack.c.bf16 %v1544, %v1543
          %v1558 = vpack.c.bf16 %v1546, %v1545
          %v1559 = vpack.c.bf16 %v1548, %v1547
          %v1560 = vpack.c.bf16 %v1550, %v1549
          %v1561 = vpack.c.bf16 %v1552, %v1551
          %v1562 = vpack.c.bf16 %v1554, %v1553
          %1563 = vst [vmem:[%s1111] sm:$0xff] %v1555
          %1564 = vst [vmem:[%s1111 + $0x8] sm:$0xff] %v1556
          %1565 = vst [vmem:[%s1111 + $0x10] sm:$0xff] %v1557
          %1566 = vst [vmem:[%s1111 + $0x18] sm:$0xff] %v1558
          %1567 = vst [vmem:[%s1111 + $0x20] sm:$0xff] %v1559
          %1568 = vst [vmem:[%s1111 + $0x28] sm:$0xff] %v1560
          %1569 = vst [vmem:[%s1111 + $0x30] sm:$0xff] %v1561
          %1570 = vst [vmem:[%s1111 + $0x38] sm:$0xff] %v1562
          %s1571 = scalar_lea.vmem [#allocation3], %s436
          %1572 = vst [vmem:[%s1571] sm:$0xff] %v1539
          %1573 = vst [vmem:[%s1571 + $0x8] sm:$0xff] %v1540
          %1574 = vst [vmem:[%s1571 + $0x10] sm:$0xff] %v1541
          %1575 = vst [vmem:[%s1571 + $0x18] sm:$0xff] %v1542
          %1576 = vst [vmem:[%s1571 + $0x20] sm:$0xff] %v1543
          %1577 = vst [vmem:[%s1571 + $0x28] sm:$0xff] %v1544
          %1578 = vst [vmem:[%s1571 + $0x30] sm:$0xff] %v1545
          %1579 = vst [vmem:[%s1571 + $0x38] sm:$0xff] %v1546
          %1580 = vst [vmem:[%s1571 + $0x40] sm:$0xff] %v1547
          %1581 = vst [vmem:[%s1571 + $0x48] sm:$0xff] %v1548
          %1582 = vst [vmem:[%s1571 + $0x50] sm:$0xff] %v1549
          %1583 = vst [vmem:[%s1571 + $0x58] sm:$0xff] %v1550
          %1584 = vst [vmem:[%s1571 + $0x60] sm:$0xff] %v1551
          %1585 = vst [vmem:[%s1571 + $0x68] sm:$0xff] %v1552
          %1586 = vst [vmem:[%s1571 + $0x70] sm:$0xff] %v1553
          %1587 = vst [vmem:[%s1571 + $0x78] sm:$0xff] %v1554
        $region96: #{tpu_custom_call.1} parent=59 // pred_fallthru
          _
        %p1588 = scmp.eq.s32.totalorder %s30, 3
        // Predicated region
        $region97: #{tpu_custom_call.1} parent=59 // pred_check
          %p1589 = pneg %p1588
        $region98: #{tpu_custom_call.1} parent=59 // pred_check_branch
          %1591 = sbr.rel (%p1589) target = $region100
        $region99: #{tpu_custom_call.1} parent=59 // pred_region
          %s1592 = sshra.s32 %s436, 4
          %s1593 = sand.u32 %s436, 15
          %s1594 = smul.addr %s1592, 8
          %s1595 = scalar_lea.vmem [#allocation2], %s1594
          %v1596 = vld [vmem:[%s1595] sm:$0xff]
          %v1597 = vld [vmem:[%s1595 + $0x8] sm:$0xff]
          %v1598 = vld [vmem:[%s1595 + $0x10] sm:$0xff]
          %v1599 = vld [vmem:[%s1595 + $0x18] sm:$0xff]
          %v1600 = vld [vmem:[%s1595 + $0x20] sm:$0xff]
          %v1601 = vld [vmem:[%s1595 + $0x28] sm:$0xff]
          %v1602 = vld [vmem:[%s1595 + $0x30] sm:$0xff]
          %v1603 = vld [vmem:[%s1595 + $0x38] sm:$0xff]
          %s1604 = sadd.s32 %s436, 128
          %s1605 = sshra.s32 %s1604, 4
          %s1606 = sand.u32 %s1604, 15
          %s1607 = smul.addr %s1605, 8
          %s1608 = scalar_lea.vmem [#allocation2], %s1607
          %v1609 = vld [vmem:[%s1608] sm:$0xff]
          %v1610 = vld [vmem:[%s1608 + $0x8] sm:$0xff]
          %v1611 = vld [vmem:[%s1608 + $0x10] sm:$0xff]
          %v1612 = vld [vmem:[%s1608 + $0x18] sm:$0xff]
          %v1613 = vld [vmem:[%s1608 + $0x20] sm:$0xff]
          %v1614 = vld [vmem:[%s1608 + $0x28] sm:$0xff]
          %v1615 = vld [vmem:[%s1608 + $0x30] sm:$0xff]
          %v1616 = vld [vmem:[%s1608 + $0x38] sm:$0xff]
          %s1617 = sadd.s32 %s436, 256
          %s1618 = sshra.s32 %s1617, 4
          %s1619 = sand.u32 %s1617, 15
          %s1620 = smul.addr %s1618, 8
          %s1621 = scalar_lea.vmem [#allocation2], %s1620
          %v1622 = vld [vmem:[%s1621] sm:$0xff]
          %v1623 = vld [vmem:[%s1621 + $0x8] sm:$0xff]
          %v1624 = vld [vmem:[%s1621 + $0x10] sm:$0xff]
          %v1625 = vld [vmem:[%s1621 + $0x18] sm:$0xff]
          %v1626 = vld [vmem:[%s1621 + $0x20] sm:$0xff]
          %v1627 = vld [vmem:[%s1621 + $0x28] sm:$0xff]
          %v1628 = vld [vmem:[%s1621 + $0x30] sm:$0xff]
          %v1629 = vld [vmem:[%s1621 + $0x38] sm:$0xff]
          %v1630 = vld [vmem:[#allocation10] sm:$0xf]
          %v1631 = vld [vmem:[#allocation10 + $0x4] sm:$0xf]
          %v1632 = vld [vmem:[#allocation10 + $0x8] sm:$0xf]
          %v1633 = vld [vmem:[#allocation10 + $0xc] sm:$0xf]
          %v1634 = vld [vmem:[#allocation10 + $0x10] sm:$0xf]
          %v1635 = vld [vmem:[#allocation10 + $0x14] sm:$0xf]
          %v1636 = vld [vmem:[#allocation10 + $0x18] sm:$0xf]
          %v1637 = vld [vmem:[#allocation10 + $0x1c] sm:$0xf]
          %v1638 = vld [vmem:[#allocation10 + $0x20] sm:$0xf]
          %v1639 = vld [vmem:[#allocation10 + $0x24] sm:$0xf]
          %v1640 = vld [vmem:[#allocation10 + $0x28] sm:$0xf]
          %v1641 = vld [vmem:[#allocation10 + $0x2c] sm:$0xf]
          %v1642 = vld [vmem:[#allocation10 + $0x30] sm:$0xf]
          %v1643 = vld [vmem:[#allocation10 + $0x34] sm:$0xf]
          %v1644 = vld [vmem:[#allocation10 + $0x38] sm:$0xf]
          %v1645 = vld [vmem:[#allocation10 + $0x3c] sm:$0xf]
          %v1646 = vld [vmem:[#allocation10 + $0x40] sm:$0xf]
          %v1647 = vld [vmem:[#allocation10 + $0x44] sm:$0xf]
          %v1648 = vld [vmem:[#allocation10 + $0x48] sm:$0xf]
          %v1649 = vld [vmem:[#allocation10 + $0x4c] sm:$0xf]
          %v1650 = vld [vmem:[#allocation10 + $0x50] sm:$0xf]
          %v1651 = vld [vmem:[#allocation10 + $0x54] sm:$0xf]
          %v1652 = vld [vmem:[#allocation10 + $0x58] sm:$0xf]
          %v1653 = vld [vmem:[#allocation10 + $0x5c] sm:$0xf]
          %v1654 = vld [vmem:[#allocation10 + $0x60] sm:$0xf]
          %v1655 = vld [vmem:[#allocation10 + $0x64] sm:$0xf]
          %v1656 = vld [vmem:[#allocation10 + $0x68] sm:$0xf]
          %v1657 = vld [vmem:[#allocation10 + $0x6c] sm:$0xf]
          %v1658 = vld [vmem:[#allocation10 + $0x70] sm:$0xf]
          %v1659 = vld [vmem:[#allocation10 + $0x74] sm:$0xf]
          %v1660 = vld [vmem:[#allocation10 + $0x78] sm:$0xf]
          %v1661 = vld [vmem:[#allocation10 + $0x7c] sm:$0xf]
          %v1662 = vld [vmem:[#allocation10 + $0x80] sm:$0xf]
          %v1663 = vld [vmem:[#allocation10 + $0x84] sm:$0xf]
          %v1664 = vld [vmem:[#allocation10 + $0x88] sm:$0xf]
          %v1665 = vld [vmem:[#allocation10 + $0x8c] sm:$0xf]
          %v1666 = vld [vmem:[#allocation10 + $0x90] sm:$0xf]
          %v1667 = vld [vmem:[#allocation10 + $0x94] sm:$0xf]
          %v1668 = vld [vmem:[#allocation10 + $0x98] sm:$0xf]
          %v1669 = vld [vmem:[#allocation10 + $0x9c] sm:$0xf]
          %v1670 = vld [vmem:[#allocation10 + $0xa0] sm:$0xf]
          %v1671 = vld [vmem:[#allocation10 + $0xa4] sm:$0xf]
          %v1672 = vld [vmem:[#allocation10 + $0xa8] sm:$0xf]
          %v1673 = vld [vmem:[#allocation10 + $0xac] sm:$0xf]
          %v1674 = vld [vmem:[#allocation10 + $0xb0] sm:$0xf]
          %v1675 = vld [vmem:[#allocation10 + $0xb4] sm:$0xf]
          %v1676 = vld [vmem:[#allocation10 + $0xb8] sm:$0xf]
          %v1677 = vld [vmem:[#allocation10 + $0xbc] sm:$0xf]
          %v1678 = vld [vmem:[%s5] sm:$0x1]
          %v1680 = vlaneseq
          %v1681 = vshrl.u32 %v1680, 7
          %v1682 = vsub.s32 0, %v1681
          %v1683 = vrot.slane %v1678, %v1682
          %v1733 = vunpack.c.l.b16 %v1630
          %v1734 = vunpack.c.l.b16 %v1631
          %v1735 = vunpack.c.l.b16 %v1632
          %v1736 = vunpack.c.l.b16 %v1633
          %v1737 = vunpack.c.l.b16 %v1634
          %v1738 = vunpack.c.l.b16 %v1635
          %v1739 = vunpack.c.l.b16 %v1636
          %v1740 = vunpack.c.l.b16 %v1637
          %v1741 = vunpack.c.l.b16 %v1638
          %v1742 = vunpack.c.l.b16 %v1639
          %v1743 = vunpack.c.l.b16 %v1640
          %v1744 = vunpack.c.l.b16 %v1641
          %v1745 = vunpack.c.l.b16 %v1642
          %v1746 = vunpack.c.l.b16 %v1643
          %v1747 = vunpack.c.l.b16 %v1644
          %v1748 = vunpack.c.l.b16 %v1645
          %v1749 = vunpack.c.l.b16 %v1646
          %v1750 = vunpack.c.l.b16 %v1647
          %v1751 = vunpack.c.l.b16 %v1648
          %v1752 = vunpack.c.l.b16 %v1649
          %v1753 = vunpack.c.l.b16 %v1650
          %v1754 = vunpack.c.l.b16 %v1651
          %v1755 = vunpack.c.l.b16 %v1652
          %v1756 = vunpack.c.l.b16 %v1653
          %v1757 = vunpack.c.l.b16 %v1654
          %v1758 = vunpack.c.l.b16 %v1655
          %v1759 = vunpack.c.l.b16 %v1656
          %v1760 = vunpack.c.l.b16 %v1657
          %v1761 = vunpack.c.l.b16 %v1658
          %v1762 = vunpack.c.l.b16 %v1659
          %v1763 = vunpack.c.l.b16 %v1660
          %v1764 = vunpack.c.l.b16 %v1661
          %v1765 = vunpack.c.l.b16 %v1662
          %v1766 = vunpack.c.l.b16 %v1663
          %v1767 = vunpack.c.l.b16 %v1664
          %v1768 = vunpack.c.l.b16 %v1665
          %v1769 = vunpack.c.l.b16 %v1666
          %v1770 = vunpack.c.l.b16 %v1667
          %v1771 = vunpack.c.l.b16 %v1668
          %v1772 = vunpack.c.l.b16 %v1669
          %v1773 = vunpack.c.l.b16 %v1670
          %v1774 = vunpack.c.l.b16 %v1671
          %v1775 = vunpack.c.l.b16 %v1672
          %v1776 = vunpack.c.l.b16 %v1673
          %v1777 = vunpack.c.l.b16 %v1674
          %v1778 = vunpack.c.l.b16 %v1675
          %v1779 = vunpack.c.l.b16 %v1676
          %v1780 = vunpack.c.l.b16 %v1677
          %v1781 = vpack.c.b16 %v1734, %v1733
          %v1782 = vpack.c.b16 %v1736, %v1735
          %v1783 = vpack.c.b16 %v1738, %v1737
          %v1784 = vpack.c.b16 %v1740, %v1739
          %v1785 = vpack.c.b16 %v1742, %v1741
          %v1786 = vpack.c.b16 %v1744, %v1743
          %v1787 = vpack.c.b16 %v1746, %v1745
          %v1788 = vpack.c.b16 %v1748, %v1747
          %v1789 = vpack.c.b16 %v1750, %v1749
          %v1790 = vpack.c.b16 %v1752, %v1751
          %v1791 = vpack.c.b16 %v1754, %v1753
          %v1792 = vpack.c.b16 %v1756, %v1755
          %v1793 = vpack.c.b16 %v1758, %v1757
          %v1794 = vpack.c.b16 %v1760, %v1759
          %v1795 = vpack.c.b16 %v1762, %v1761
          %v1796 = vpack.c.b16 %v1764, %v1763
          %v1797 = vpack.c.b16 %v1766, %v1765
          %v1798 = vpack.c.b16 %v1768, %v1767
          %v1799 = vpack.c.b16 %v1770, %v1769
          %v1800 = vpack.c.b16 %v1772, %v1771
          %v1801 = vpack.c.b16 %v1774, %v1773
          %v1802 = vpack.c.b16 %v1776, %v1775
          %v1803 = vpack.c.b16 %v1778, %v1777
          %v1804 = vpack.c.b16 %v1780, %v1779
          %1829 = vmatprep.subr.bf16.mxu0 0
          %1830 = vmatpush1.bf16.msra.mxu0 %v1781
          %1831 = vmatprep.subr.bf16.mxu0 0
          %1832 = vmatpush1.bf16.msra.mxu0 %v1782
          %1833 = vmatprep.subr.bf16.mxu0 0
          %1834 = vmatpush1.bf16.msra.mxu0 %v1783
          %1835 = vmatprep.subr.bf16.mxu0 0
          %1836 = vmatpush1.bf16.msra.mxu0 %v1784
          %1837 = vmatprep.subr.bf16.mxu0 0
          %1838 = vmatpush1.bf16.msra.mxu0 %v1785
          %1839 = vmatprep.subr.bf16.mxu0 0
          %1840 = vmatpush1.bf16.msra.mxu0 %v1786
          %1841 = vmatprep.subr.bf16.mxu0 0
          %1842 = vmatpush1.bf16.msra.mxu0 %v1787
          %1843 = vmatprep.subr.bf16.mxu0 0
          %1844 = vmatpush1.bf16.msra.mxu0 %v1788
          %1845 = vmatprep.subr.bf16.mxu0 0
          %1846 = vmatpush1.bf16.msra.mxu0 %v1789
          %1847 = vmatprep.subr.bf16.mxu0 0
          %1848 = vmatpush1.bf16.msra.mxu0 %v1790
          %1849 = vmatprep.subr.bf16.mxu0 0
          %1850 = vmatpush1.bf16.msra.mxu0 %v1791
          %1851 = vmatprep.subr.bf16.mxu0 0
          %1852 = vmatpush1.bf16.msra.mxu0 %v1792
          %1853 = vmatprep.subr.bf16.mxu0 0
          %1854 = vmatpush1.bf16.msra.mxu0 %v1793
          %1855 = vmatprep.subr.bf16.mxu0 0
          %1856 = vmatpush1.bf16.msra.mxu0 %v1794
          %1857 = vmatprep.subr.bf16.mxu0 0
          %1858 = vmatpush1.bf16.msra.mxu0 %v1795
          %1859 = vmatprep.subr.bf16.mxu0 0
          %1860 = vmatpush1.bf16.msra.mxu0 %v1796
          %1861 = vmatprep.mubr.bf16.mxu0 %v1609
          %1862 = vmatmul.mubr.bf16.gmra.mrb[0].mxu0 %v1596
          %v1863 = vpop.f32.mrb[0].mxu0
          %v1864 = vadd.f32 %v1683, %v1863
          %v1865 = vpop.f32.mrb[0].mxu0
          %v1866 = vpop.f32.mrb[0].mxu0
          %v1867 = vadd.f32 %v1683, %v1866
          %v1868 = vpop.f32.mrb[0].mxu0
          %1869 = vmatprep.mubr.bf16.mxu0 %v1610
          %1870 = vmatmul.mubr.bf16.gmra.mrb[0].mxu0 %v1597
          %v1871 = vpop.f32.mrb[0].mxu0
          %v1872 = vadd.f32 %v1683, %v1871
          %v1873 = vpop.f32.mrb[0].mxu0
          %v1874 = vpop.f32.mrb[0].mxu0
          %v1875 = vadd.f32 %v1683, %v1874
          %v1876 = vpop.f32.mrb[0].mxu0
          %1877 = vmatprep.mubr.bf16.mxu0 %v1611
          %1878 = vmatmul.mubr.bf16.gmra.mrb[0].mxu0 %v1598
          %v1879 = vpop.f32.mrb[0].mxu0
          %v1880 = vadd.f32 %v1683, %v1879
          %v1881 = vpop.f32.mrb[0].mxu0
          %v1882 = vpop.f32.mrb[0].mxu0
          %v1883 = vadd.f32 %v1683, %v1882
          %v1884 = vpop.f32.mrb[0].mxu0
          %1885 = vmatprep.mubr.bf16.mxu0 %v1612
          %1886 = vmatmul.mubr.bf16.gmra.mrb[0].mxu0 %v1599
          %v1887 = vpop.f32.mrb[0].mxu0
          %v1888 = vadd.f32 %v1683, %v1887
          %v1889 = vpop.f32.mrb[0].mxu0
          %v1890 = vpop.f32.mrb[0].mxu0
          %v1891 = vadd.f32 %v1683, %v1890
          %v1892 = vpop.f32.mrb[0].mxu0
          %1893 = vmatprep.mubr.bf16.mxu0 %v1613
          %1894 = vmatmul.mubr.bf16.gmra.mrb[0].mxu0 %v1600
          %v1895 = vpop.f32.mrb[0].mxu0
          %v1896 = vadd.f32 %v1683, %v1895
          %v1897 = vpop.f32.mrb[0].mxu0
          %v1898 = vpop.f32.mrb[0].mxu0
          %v1899 = vadd.f32 %v1683, %v1898
          %v1900 = vpop.f32.mrb[0].mxu0
          %1901 = vmatprep.mubr.bf16.mxu0 %v1614
          %1902 = vmatmul.mubr.bf16.gmra.mrb[0].mxu0 %v1601
          %v1903 = vpop.f32.mrb[0].mxu0
          %v1904 = vadd.f32 %v1683, %v1903
          %v1905 = vpop.f32.mrb[0].mxu0
          %v1906 = vpop.f32.mrb[0].mxu0
          %v1907 = vadd.f32 %v1683, %v1906
          %v1908 = vpop.f32.mrb[0].mxu0
          %1909 = vmatprep.mubr.bf16.mxu0 %v1615
          %1910 = vmatmul.mubr.bf16.gmra.mrb[0].mxu0 %v1602
          %v1911 = vpop.f32.mrb[0].mxu0
          %v1912 = vadd.f32 %v1683, %v1911
          %v1913 = vpop.f32.mrb[0].mxu0
          %v1914 = vpop.f32.mrb[0].mxu0
          %v1915 = vadd.f32 %v1683, %v1914
          %v1916 = vpop.f32.mrb[0].mxu0
          %1917 = vmatprep.mubr.bf16.mxu0 %v1616
          %1918 = vmatmul.mubr.bf16.gmra.mrb[0].mxu0 %v1603
          %v1919 = vpop.f32.mrb[0].mxu0
          %v1920 = vadd.f32 %v1683, %v1919
          %v1921 = vpop.f32.mrb[0].mxu0
          %v1922 = vpop.f32.mrb[0].mxu0
          %v1923 = vadd.f32 %v1683, %v1922
          %v1924 = vpop.f32.mrb[0].mxu0
          %1925 = vdwg.mxu0
          %1926 = vmatprep.subr.bf16.mxu0 0
          %1927 = vmatpush1.bf16.msra.mxu0 %v1797
          %1928 = vmatprep.subr.bf16.mxu0 0
          %1929 = vmatpush1.bf16.msra.mxu0 %v1798
          %1930 = vmatprep.subr.bf16.mxu0 0
          %1931 = vmatpush1.bf16.msra.mxu0 %v1799
          %1932 = vmatprep.subr.bf16.mxu0 0
          %1933 = vmatpush1.bf16.msra.mxu0 %v1800
          %1934 = vmatprep.subr.bf16.mxu0 0
          %1935 = vmatpush1.bf16.msra.mxu0 %v1801
          %1936 = vmatprep.subr.bf16.mxu0 0
          %1937 = vmatpush1.bf16.msra.mxu0 %v1802
          %1938 = vmatprep.subr.bf16.mxu0 0
          %1939 = vmatpush1.bf16.msra.mxu0 %v1803
          %1940 = vmatprep.subr.bf16.mxu0 0
          %1941 = vmatpush1.bf16.msra.mxu0 %v1804
          %1942 = vmatprep.subr.bf16.mxu0 0
          %1943 = vmatpush1.bf16.msra.mxu0 0
          %1944 = vmatprep.subr.bf16.mxu0 0
          %1945 = vmatpush1.bf16.msra.mxu0 0
          %1946 = vmatprep.subr.bf16.mxu0 0
          %1947 = vmatpush1.bf16.msra.mxu0 0
          %1948 = vmatprep.subr.bf16.mxu0 0
          %1949 = vmatpush1.bf16.msra.mxu0 0
          %1950 = vmatprep.subr.bf16.mxu0 0
          %1951 = vmatpush1.bf16.msra.mxu0 0
          %1952 = vmatprep.subr.bf16.mxu0 0
          %1953 = vmatpush1.bf16.msra.mxu0 0
          %1954 = vmatprep.subr.bf16.mxu0 0
          %1955 = vmatpush1.bf16.msra.mxu0 0
          %1956 = vmatprep.subr.bf16.mxu0 0
          %1957 = vmatpush1.bf16.msra.mxu0 0
          %1958 = vmatprep.mubr.bf16.mxu0 0
          %1959 = vmatmul.mubr.bf16.gmra.mrb[0].mxu0 %v1622
          %v1960 = vpop.f32.mrb[0].mxu0
          %v1961 = vadd.f32 %v1864, %v1960
          %v1962 = vpop.f32.mrb[0].mxu0
          %v1963 = vpop.f32.mrb[0].mxu0
          %v1964 = vadd.f32 %v1867, %v1963
          %v1965 = vpop.f32.mrb[0].mxu0
          %1966 = vmatprep.mubr.bf16.mxu0 0
          %1967 = vmatmul.mubr.bf16.gmra.mrb[0].mxu0 %v1623
          %v1968 = vpop.f32.mrb[0].mxu0
          %v1969 = vadd.f32 %v1872, %v1968
          %v1970 = vpop.f32.mrb[0].mxu0
          %v1971 = vpop.f32.mrb[0].mxu0
          %v1972 = vadd.f32 %v1875, %v1971
          %v1973 = vpop.f32.mrb[0].mxu0
          %1974 = vmatprep.mubr.bf16.mxu0 0
          %1975 = vmatmul.mubr.bf16.gmra.mrb[0].mxu0 %v1624
          %v1976 = vpop.f32.mrb[0].mxu0
          %v1977 = vadd.f32 %v1880, %v1976
          %v1978 = vpop.f32.mrb[0].mxu0
          %v1979 = vpop.f32.mrb[0].mxu0
          %v1980 = vadd.f32 %v1883, %v1979
          %v1981 = vpop.f32.mrb[0].mxu0
          %1982 = vmatprep.mubr.bf16.mxu0 0
          %1983 = vmatmul.mubr.bf16.gmra.mrb[0].mxu0 %v1625
          %v1984 = vpop.f32.mrb[0].mxu0
          %v1985 = vadd.f32 %v1888, %v1984
          %v1986 = vpop.f32.mrb[0].mxu0
          %v1987 = vpop.f32.mrb[0].mxu0
          %v1988 = vadd.f32 %v1891, %v1987
          %v1989 = vpop.f32.mrb[0].mxu0
          %1990 = vmatprep.mubr.bf16.mxu0 0
          %1991 = vmatmul.mubr.bf16.gmra.mrb[0].mxu0 %v1626
          %v1992 = vpop.f32.mrb[0].mxu0
          %v1993 = vadd.f32 %v1896, %v1992
          %v1994 = vpop.f32.mrb[0].mxu0
          %v1995 = vpop.f32.mrb[0].mxu0
          %v1996 = vadd.f32 %v1899, %v1995
          %v1997 = vpop.f32.mrb[0].mxu0
          %1998 = vmatprep.mubr.bf16.mxu0 0
          %1999 = vmatmul.mubr.bf16.gmra.mrb[0].mxu0 %v1627
          %v2000 = vpop.f32.mrb[0].mxu0
          %v2001 = vadd.f32 %v1904, %v2000
          %v2002 = vpop.f32.mrb[0].mxu0
          %v2003 = vpop.f32.mrb[0].mxu0
          %v2004 = vadd.f32 %v1907, %v2003
          %v2005 = vpop.f32.mrb[0].mxu0
          %2006 = vmatprep.mubr.bf16.mxu0 0
          %2007 = vmatmul.mubr.bf16.gmra.mrb[0].mxu0 %v1628
          %v2008 = vpop.f32.mrb[0].mxu0
          %v2009 = vadd.f32 %v1912, %v2008
          %v2010 = vpop.f32.mrb[0].mxu0
          %v2011 = vpop.f32.mrb[0].mxu0
          %v2012 = vadd.f32 %v1915, %v2011
          %v2013 = vpop.f32.mrb[0].mxu0
          %2014 = vmatprep.mubr.bf16.mxu0 0
          %2015 = vmatmul.mubr.bf16.gmra.mrb[0].mxu0 %v1629
          %v2016 = vpop.f32.mrb[0].mxu0
          %v2017 = vadd.f32 %v1920, %v2016
          %v2018 = vpop.f32.mrb[0].mxu0
          %v2019 = vpop.f32.mrb[0].mxu0
          %v2020 = vadd.f32 %v1923, %v2019
          %v2021 = vpop.f32.mrb[0].mxu0
          %2022 = vdwg.mxu0
          %v2023 = vmax.f32 %v1961, 0.0
          %v2024 = vmax.f32 %v1964, 0.0
          %v2025 = vmax.f32 %v1969, 0.0
          %v2026 = vmax.f32 %v1972, 0.0
          %v2027 = vmax.f32 %v1977, 0.0
          %v2028 = vmax.f32 %v1980, 0.0
          %v2029 = vmax.f32 %v1985, 0.0
          %v2030 = vmax.f32 %v1988, 0.0
          %v2031 = vmax.f32 %v1993, 0.0
          %v2032 = vmax.f32 %v1996, 0.0
          %v2033 = vmax.f32 %v2001, 0.0
          %v2034 = vmax.f32 %v2004, 0.0
          %v2035 = vmax.f32 %v2009, 0.0
          %v2036 = vmax.f32 %v2012, 0.0
          %v2037 = vmax.f32 %v2017, 0.0
          %v2038 = vmax.f32 %v2020, 0.0
          %v2039 = vpack.c.bf16 %v2024, %v2023
          %v2040 = vpack.c.bf16 %v2026, %v2025
          %v2041 = vpack.c.bf16 %v2028, %v2027
          %v2042 = vpack.c.bf16 %v2030, %v2029
          %v2043 = vpack.c.bf16 %v2032, %v2031
          %v2044 = vpack.c.bf16 %v2034, %v2033
          %v2045 = vpack.c.bf16 %v2036, %v2035
          %v2046 = vpack.c.bf16 %v2038, %v2037
          %v2047 = vld [vmem:[#allocation12] sm:$0xf]
          %v2048 = vld [vmem:[#allocation12 + $0x4] sm:$0xf]
          %v2049 = vld [vmem:[#allocation12 + $0x8] sm:$0xf]
          %v2050 = vld [vmem:[#allocation12 + $0xc] sm:$0xf]
          %v2051 = vld [vmem:[#allocation12 + $0x10] sm:$0xf]
          %v2052 = vld [vmem:[#allocation12 + $0x14] sm:$0xf]
          %v2053 = vld [vmem:[#allocation12 + $0x18] sm:$0xf]
          %v2054 = vld [vmem:[#allocation12 + $0x1c] sm:$0xf]
          %v2055 = vld [vmem:[#allocation12 + $0x20] sm:$0xf]
          %v2056 = vld [vmem:[#allocation12 + $0x24] sm:$0xf]
          %v2057 = vld [vmem:[#allocation12 + $0x28] sm:$0xf]
          %v2058 = vld [vmem:[#allocation12 + $0x2c] sm:$0xf]
          %v2059 = vld [vmem:[#allocation12 + $0x30] sm:$0xf]
          %v2060 = vld [vmem:[#allocation12 + $0x34] sm:$0xf]
          %v2061 = vld [vmem:[#allocation12 + $0x38] sm:$0xf]
          %v2062 = vld [vmem:[#allocation12 + $0x3c] sm:$0xf]
          %v2063 = vld [vmem:[%s7] sm:$0x1]
          %v2065 = vlaneseq
          %v2066 = vshrl.u32 %v2065, 7
          %v2067 = vsub.s32 0, %v2066
          %v2068 = vrot.slane %v2063, %v2067
          %v2086 = vunpack.c.l.b16 %v2047
          %v2087 = vunpack.c.l.b16 %v2048
          %v2088 = vunpack.c.l.b16 %v2049
          %v2089 = vunpack.c.l.b16 %v2050
          %v2090 = vunpack.c.l.b16 %v2051
          %v2091 = vunpack.c.l.b16 %v2052
          %v2092 = vunpack.c.l.b16 %v2053
          %v2093 = vunpack.c.l.b16 %v2054
          %v2094 = vunpack.c.l.b16 %v2055
          %v2095 = vunpack.c.l.b16 %v2056
          %v2096 = vunpack.c.l.b16 %v2057
          %v2097 = vunpack.c.l.b16 %v2058
          %v2098 = vunpack.c.l.b16 %v2059
          %v2099 = vunpack.c.l.b16 %v2060
          %v2100 = vunpack.c.l.b16 %v2061
          %v2101 = vunpack.c.l.b16 %v2062
          %v2102 = vpack.c.b16 %v2087, %v2086
          %v2103 = vpack.c.b16 %v2089, %v2088
          %v2104 = vpack.c.b16 %v2091, %v2090
          %v2105 = vpack.c.b16 %v2093, %v2092
          %v2106 = vpack.c.b16 %v2095, %v2094
          %v2107 = vpack.c.b16 %v2097, %v2096
          %v2108 = vpack.c.b16 %v2099, %v2098
          %v2109 = vpack.c.b16 %v2101, %v2100
          %2118 = vmatprep.subr.bf16.mxu0 0
          %2119 = vmatpush1.bf16.msra.mxu0 %v2102
          %2120 = vmatprep.subr.bf16.mxu0 0
          %2121 = vmatpush1.bf16.msra.mxu0 %v2103
          %2122 = vmatprep.subr.bf16.mxu0 0
          %2123 = vmatpush1.bf16.msra.mxu0 %v2104
          %2124 = vmatprep.subr.bf16.mxu0 0
          %2125 = vmatpush1.bf16.msra.mxu0 %v2105
          %2126 = vmatprep.subr.bf16.mxu0 0
          %2127 = vmatpush1.bf16.msra.mxu0 %v2106
          %2128 = vmatprep.subr.bf16.mxu0 0
          %2129 = vmatpush1.bf16.msra.mxu0 %v2107
          %2130 = vmatprep.subr.bf16.mxu0 0
          %2131 = vmatpush1.bf16.msra.mxu0 %v2108
          %2132 = vmatprep.subr.bf16.mxu0 0
          %2133 = vmatpush1.bf16.msra.mxu0 %v2109
          %2134 = vmatprep.subr.bf16.mxu0 0
          %2135 = vmatpush1.bf16.msra.mxu0 0
          %2136 = vmatprep.subr.bf16.mxu0 0
          %2137 = vmatpush1.bf16.msra.mxu0 0
          %2138 = vmatprep.subr.bf16.mxu0 0
          %2139 = vmatpush1.bf16.msra.mxu0 0
          %2140 = vmatprep.subr.bf16.mxu0 0
          %2141 = vmatpush1.bf16.msra.mxu0 0
          %2142 = vmatprep.subr.bf16.mxu0 0
          %2143 = vmatpush1.bf16.msra.mxu0 0
          %2144 = vmatprep.subr.bf16.mxu0 0
          %2145 = vmatpush1.bf16.msra.mxu0 0
          %2146 = vmatprep.subr.bf16.mxu0 0
          %2147 = vmatpush1.bf16.msra.mxu0 0
          %2148 = vmatprep.subr.bf16.mxu0 0
          %2149 = vmatpush1.bf16.msra.mxu0 0
          %2150 = vmatprep.mubr.bf16.mxu0 0
          %2151 = vmatmul.mubr.bf16.gmra.mrb[0].mxu0 %v2039
          %v2152 = vpop.f32.mrb[0].mxu0
          %v2153 = vadd.f32 %v2068, %v2152
          %v2154 = vpop.f32.mrb[0].mxu0
          %v2155 = vpop.f32.mrb[0].mxu0
          %v2156 = vadd.f32 %v2068, %v2155
          %v2157 = vpop.f32.mrb[0].mxu0
          %2158 = vmatprep.mubr.bf16.mxu0 0
          %2159 = vmatmul.mubr.bf16.gmra.mrb[0].mxu0 %v2040
          %v2160 = vpop.f32.mrb[0].mxu0
          %v2161 = vadd.f32 %v2068, %v2160
          %v2162 = vpop.f32.mrb[0].mxu0
          %v2163 = vpop.f32.mrb[0].mxu0
          %v2164 = vadd.f32 %v2068, %v2163
          %v2165 = vpop.f32.mrb[0].mxu0
          %2166 = vmatprep.mubr.bf16.mxu0 0
          %2167 = vmatmul.mubr.bf16.gmra.mrb[0].mxu0 %v2041
          %v2168 = vpop.f32.mrb[0].mxu0
          %v2169 = vadd.f32 %v2068, %v2168
          %v2170 = vpop.f32.mrb[0].mxu0
          %v2171 = vpop.f32.mrb[0].mxu0
          %v2172 = vadd.f32 %v2068, %v2171
          %v2173 = vpop.f32.mrb[0].mxu0
          %2174 = vmatprep.mubr.bf16.mxu0 0
          %2175 = vmatmul.mubr.bf16.gmra.mrb[0].mxu0 %v2042
          %v2176 = vpop.f32.mrb[0].mxu0
          %v2177 = vadd.f32 %v2068, %v2176
          %v2178 = vpop.f32.mrb[0].mxu0
          %v2179 = vpop.f32.mrb[0].mxu0
          %v2180 = vadd.f32 %v2068, %v2179
          %v2181 = vpop.f32.mrb[0].mxu0
          %2182 = vmatprep.mubr.bf16.mxu0 0
          %2183 = vmatmul.mubr.bf16.gmra.mrb[0].mxu0 %v2043
          %v2184 = vpop.f32.mrb[0].mxu0
          %v2185 = vadd.f32 %v2068, %v2184
          %v2186 = vpop.f32.mrb[0].mxu0
          %v2187 = vpop.f32.mrb[0].mxu0
          %v2188 = vadd.f32 %v2068, %v2187
          %v2189 = vpop.f32.mrb[0].mxu0
          %2190 = vmatprep.mubr.bf16.mxu0 0
          %2191 = vmatmul.mubr.bf16.gmra.mrb[0].mxu0 %v2044
          %v2192 = vpop.f32.mrb[0].mxu0
          %v2193 = vadd.f32 %v2068, %v2192
          %v2194 = vpop.f32.mrb[0].mxu0
          %v2195 = vpop.f32.mrb[0].mxu0
          %v2196 = vadd.f32 %v2068, %v2195
          %v2197 = vpop.f32.mrb[0].mxu0
          %2198 = vmatprep.mubr.bf16.mxu0 0
          %2199 = vmatmul.mubr.bf16.gmra.mrb[0].mxu0 %v2045
          %v2200 = vpop.f32.mrb[0].mxu0
          %v2201 = vadd.f32 %v2068, %v2200
          %v2202 = vpop.f32.mrb[0].mxu0
          %v2203 = vpop.f32.mrb[0].mxu0
          %v2204 = vadd.f32 %v2068, %v2203
          %v2205 = vpop.f32.mrb[0].mxu0
          %2206 = vmatprep.mubr.bf16.mxu0 0
          %2207 = vmatmul.mubr.bf16.gmra.mrb[0].mxu0 %v2046
          %v2208 = vpop.f32.mrb[0].mxu0
          %v2209 = vadd.f32 %v2068, %v2208
          %v2210 = vpop.f32.mrb[0].mxu0
          %v2211 = vpop.f32.mrb[0].mxu0
          %v2212 = vadd.f32 %v2068, %v2211
          %v2213 = vpop.f32.mrb[0].mxu0
          %2214 = vdwg.mxu0
          %v2215 = vmax.f32 %v2153, 0.0
          %v2216 = vmax.f32 %v2156, 0.0
          %v2217 = vmax.f32 %v2161, 0.0
          %v2218 = vmax.f32 %v2164, 0.0
          %v2219 = vmax.f32 %v2169, 0.0
          %v2220 = vmax.f32 %v2172, 0.0
          %v2221 = vmax.f32 %v2177, 0.0
          %v2222 = vmax.f32 %v2180, 0.0
          %v2223 = vmax.f32 %v2185, 0.0
          %v2224 = vmax.f32 %v2188, 0.0
          %v2225 = vmax.f32 %v2193, 0.0
          %v2226 = vmax.f32 %v2196, 0.0
          %v2227 = vmax.f32 %v2201, 0.0
          %v2228 = vmax.f32 %v2204, 0.0
          %v2229 = vmax.f32 %v2209, 0.0
          %v2230 = vmax.f32 %v2212, 0.0
          %v2231 = vpack.c.bf16 %v2216, %v2215
          %v2232 = vpack.c.bf16 %v2218, %v2217
          %v2233 = vpack.c.bf16 %v2220, %v2219
          %v2234 = vpack.c.bf16 %v2222, %v2221
          %v2235 = vpack.c.bf16 %v2224, %v2223
          %v2236 = vpack.c.bf16 %v2226, %v2225
          %v2237 = vpack.c.bf16 %v2228, %v2227
          %v2238 = vpack.c.bf16 %v2230, %v2229
          %v2239 = vld [vmem:[#allocation13] sm:$0xf]
          %v2240 = vld [vmem:[#allocation13 + $0x4] sm:$0xf]
          %v2241 = vld [vmem:[#allocation13 + $0x8] sm:$0xf]
          %v2242 = vld [vmem:[#allocation13 + $0xc] sm:$0xf]
          %v2243 = vld [vmem:[#allocation13 + $0x10] sm:$0xf]
          %v2244 = vld [vmem:[#allocation13 + $0x14] sm:$0xf]
          %v2245 = vld [vmem:[#allocation13 + $0x18] sm:$0xf]
          %v2246 = vld [vmem:[#allocation13 + $0x1c] sm:$0xf]
          %v2247 = vld [vmem:[#allocation13 + $0x20] sm:$0xf]
          %v2248 = vld [vmem:[#allocation13 + $0x24] sm:$0xf]
          %v2249 = vld [vmem:[#allocation13 + $0x28] sm:$0xf]
          %v2250 = vld [vmem:[#allocation13 + $0x2c] sm:$0xf]
          %v2251 = vld [vmem:[#allocation13 + $0x30] sm:$0xf]
          %v2252 = vld [vmem:[#allocation13 + $0x34] sm:$0xf]
          %v2253 = vld [vmem:[#allocation13 + $0x38] sm:$0xf]
          %v2254 = vld [vmem:[#allocation13 + $0x3c] sm:$0xf]
          %v2255 = vld [vmem:[%s9] sm:$0x1]
          %v2257 = vlaneseq
          %v2258 = vshrl.u32 %v2257, 7
          %v2259 = vsub.s32 0, %v2258
          %v2260 = vrot.slane %v2255, %v2259
          %v2278 = vunpack.c.l.b16 %v2239
          %v2279 = vunpack.c.l.b16 %v2240
          %v2280 = vunpack.c.l.b16 %v2241
          %v2281 = vunpack.c.l.b16 %v2242
          %v2282 = vunpack.c.l.b16 %v2243
          %v2283 = vunpack.c.l.b16 %v2244
          %v2284 = vunpack.c.l.b16 %v2245
          %v2285 = vunpack.c.l.b16 %v2246
          %v2286 = vunpack.c.l.b16 %v2247
          %v2287 = vunpack.c.l.b16 %v2248
          %v2288 = vunpack.c.l.b16 %v2249
          %v2289 = vunpack.c.l.b16 %v2250
          %v2290 = vunpack.c.l.b16 %v2251
          %v2291 = vunpack.c.l.b16 %v2252
          %v2292 = vunpack.c.l.b16 %v2253
          %v2293 = vunpack.c.l.b16 %v2254
          %v2294 = vpack.c.b16 %v2279, %v2278
          %v2295 = vpack.c.b16 %v2281, %v2280
          %v2296 = vpack.c.b16 %v2283, %v2282
          %v2297 = vpack.c.b16 %v2285, %v2284
          %v2298 = vpack.c.b16 %v2287, %v2286
          %v2299 = vpack.c.b16 %v2289, %v2288
          %v2300 = vpack.c.b16 %v2291, %v2290
          %v2301 = vpack.c.b16 %v2293, %v2292
          %2310 = vmatprep.subr.bf16.mxu0 0
          %2311 = vmatpush1.bf16.msra.mxu0 %v2294
          %2312 = vmatprep.subr.bf16.mxu0 0
          %2313 = vmatpush1.bf16.msra.mxu0 %v2295
          %2314 = vmatprep.subr.bf16.mxu0 0
          %2315 = vmatpush1.bf16.msra.mxu0 %v2296
          %2316 = vmatprep.subr.bf16.mxu0 0
          %2317 = vmatpush1.bf16.msra.mxu0 %v2297
          %2318 = vmatprep.subr.bf16.mxu0 0
          %2319 = vmatpush1.bf16.msra.mxu0 %v2298
          %2320 = vmatprep.subr.bf16.mxu0 0
          %2321 = vmatpush1.bf16.msra.mxu0 %v2299
          %2322 = vmatprep.subr.bf16.mxu0 0
          %2323 = vmatpush1.bf16.msra.mxu0 %v2300
          %2324 = vmatprep.subr.bf16.mxu0 0
          %2325 = vmatpush1.bf16.msra.mxu0 %v2301
          %2326 = vmatprep.subr.bf16.mxu0 0
          %2327 = vmatpush1.bf16.msra.mxu0 0
          %2328 = vmatprep.subr.bf16.mxu0 0
          %2329 = vmatpush1.bf16.msra.mxu0 0
          %2330 = vmatprep.subr.bf16.mxu0 0
          %2331 = vmatpush1.bf16.msra.mxu0 0
          %2332 = vmatprep.subr.bf16.mxu0 0
          %2333 = vmatpush1.bf16.msra.mxu0 0
          %2334 = vmatprep.subr.bf16.mxu0 0
          %2335 = vmatpush1.bf16.msra.mxu0 0
          %2336 = vmatprep.subr.bf16.mxu0 0
          %2337 = vmatpush1.bf16.msra.mxu0 0
          %2338 = vmatprep.subr.bf16.mxu0 0
          %2339 = vmatpush1.bf16.msra.mxu0 0
          %2340 = vmatprep.subr.bf16.mxu0 0
          %2341 = vmatpush1.bf16.msra.mxu0 0
          %2342 = vmatprep.mubr.bf16.mxu0 0
          %2343 = vmatmul.mubr.bf16.gmra.mrb[0].mxu0 %v2231
          %v2344 = vpop.f32.mrb[0].mxu0
          %v2345 = vadd.f32 %v2260, %v2344
          %v2346 = vpop.f32.mrb[0].mxu0
          %v2347 = vpop.f32.mrb[0].mxu0
          %v2348 = vadd.f32 %v2260, %v2347
          %v2349 = vpop.f32.mrb[0].mxu0
          %2350 = vmatprep.mubr.bf16.mxu0 0
          %2351 = vmatmul.mubr.bf16.gmra.mrb[0].mxu0 %v2232
          %v2352 = vpop.f32.mrb[0].mxu0
          %v2353 = vadd.f32 %v2260, %v2352
          %v2354 = vpop.f32.mrb[0].mxu0
          %v2355 = vpop.f32.mrb[0].mxu0
          %v2356 = vadd.f32 %v2260, %v2355
          %v2357 = vpop.f32.mrb[0].mxu0
          %2358 = vmatprep.mubr.bf16.mxu0 0
          %2359 = vmatmul.mubr.bf16.gmra.mrb[0].mxu0 %v2233
          %v2360 = vpop.f32.mrb[0].mxu0
          %v2361 = vadd.f32 %v2260, %v2360
          %v2362 = vpop.f32.mrb[0].mxu0
          %v2363 = vpop.f32.mrb[0].mxu0
          %v2364 = vadd.f32 %v2260, %v2363
          %v2365 = vpop.f32.mrb[0].mxu0
          %2366 = vmatprep.mubr.bf16.mxu0 0
          %2367 = vmatmul.mubr.bf16.gmra.mrb[0].mxu0 %v2234
          %v2368 = vpop.f32.mrb[0].mxu0
          %v2369 = vadd.f32 %v2260, %v2368
          %v2370 = vpop.f32.mrb[0].mxu0
          %v2371 = vpop.f32.mrb[0].mxu0
          %v2372 = vadd.f32 %v2260, %v2371
          %v2373 = vpop.f32.mrb[0].mxu0
          %2374 = vmatprep.mubr.bf16.mxu0 0
          %2375 = vmatmul.mubr.bf16.gmra.mrb[0].mxu0 %v2235
          %v2376 = vpop.f32.mrb[0].mxu0
          %v2377 = vadd.f32 %v2260, %v2376
          %v2378 = vpop.f32.mrb[0].mxu0
          %v2379 = vpop.f32.mrb[0].mxu0
          %v2380 = vadd.f32 %v2260, %v2379
          %v2381 = vpop.f32.mrb[0].mxu0
          %2382 = vmatprep.mubr.bf16.mxu0 0
          %2383 = vmatmul.mubr.bf16.gmra.mrb[0].mxu0 %v2236
          %v2384 = vpop.f32.mrb[0].mxu0
          %v2385 = vadd.f32 %v2260, %v2384
          %v2386 = vpop.f32.mrb[0].mxu0
          %v2387 = vpop.f32.mrb[0].mxu0
          %v2388 = vadd.f32 %v2260, %v2387
          %v2389 = vpop.f32.mrb[0].mxu0
          %2390 = vmatprep.mubr.bf16.mxu0 0
          %2391 = vmatmul.mubr.bf16.gmra.mrb[0].mxu0 %v2237
          %v2392 = vpop.f32.mrb[0].mxu0
          %v2393 = vadd.f32 %v2260, %v2392
          %v2394 = vpop.f32.mrb[0].mxu0
          %v2395 = vpop.f32.mrb[0].mxu0
          %v2396 = vadd.f32 %v2260, %v2395
          %v2397 = vpop.f32.mrb[0].mxu0
          %2398 = vmatprep.mubr.bf16.mxu0 0
          %2399 = vmatmul.mubr.bf16.gmra.mrb[0].mxu0 %v2238
          %v2400 = vpop.f32.mrb[0].mxu0
          %v2401 = vadd.f32 %v2260, %v2400
          %v2402 = vpop.f32.mrb[0].mxu0
          %v2403 = vpop.f32.mrb[0].mxu0
          %v2404 = vadd.f32 %v2260, %v2403
          %v2405 = vpop.f32.mrb[0].mxu0
          %2406 = vdwg.mxu0
          %s2407 = scalar_lea.vmem [#allocation15], %s436
          %2408 = vst [vmem:[%s2407] sm:$0xff] %v2345
          %2409 = vst [vmem:[%s2407 + $0x8] sm:$0xff] %v2348
          %2410 = vst [vmem:[%s2407 + $0x10] sm:$0xff] %v2353
          %2411 = vst [vmem:[%s2407 + $0x18] sm:$0xff] %v2356
          %2412 = vst [vmem:[%s2407 + $0x20] sm:$0xff] %v2361
          %2413 = vst [vmem:[%s2407 + $0x28] sm:$0xff] %v2364
          %2414 = vst [vmem:[%s2407 + $0x30] sm:$0xff] %v2369
          %2415 = vst [vmem:[%s2407 + $0x38] sm:$0xff] %v2372
          %2416 = vst [vmem:[%s2407 + $0x40] sm:$0xff] %v2377
          %2417 = vst [vmem:[%s2407 + $0x48] sm:$0xff] %v2380
          %2418 = vst [vmem:[%s2407 + $0x50] sm:$0xff] %v2385
          %2419 = vst [vmem:[%s2407 + $0x58] sm:$0xff] %v2388
          %2420 = vst [vmem:[%s2407 + $0x60] sm:$0xff] %v2393
          %2421 = vst [vmem:[%s2407 + $0x68] sm:$0xff] %v2396
          %2422 = vst [vmem:[%s2407 + $0x70] sm:$0xff] %v2401
          %2423 = vst [vmem:[%s2407 + $0x78] sm:$0xff] %v2404
        $region100: #{tpu_custom_call.1} parent=59 // pred_fallthru
          _
        // Predicated region
        $region101: #{tpu_custom_call.1} parent=59 // pred_check
          %p2424 = pneg %p266
        $region102: #{tpu_custom_call.1} parent=59 // pred_check_branch
          %2426 = sbr.rel (%p2424) target = $region104
        $region103: #{tpu_custom_call.1} parent=59 // pred_region
          %s2428 = ssub.s32 2048, 2048
          %2429 = vsyncadd [#allocation6], %s2428
          %s2430 = sshll.u32 [#allocation15], 4
          %s2431 = int_to_ptr.vmem [resolvable:$true] %s2430
          %2436 = dma.vmem_to_hbm [thread:$0]  %s2431, 2048, %s10, [#allocation6], 128, 128, 8
        $region104: #{tpu_custom_call.1} parent=59 // pred_fallthru
          _
        // Predicated region
        $region105: #{tpu_custom_call.1} parent=59 // pred_check
          %p2437 = pneg %p266
        $region106: #{tpu_custom_call.1} parent=59 // pred_check_branch
          %2439 = sbr.rel (%p2437) target = $region108
        $region107: #{tpu_custom_call.1} parent=59 // pred_region
          %2440 = dma.done [#allocation6], 2048
        $region108: #{tpu_custom_call.1} parent=59 // pred_fallthru
          _
      $region60: #{tpu_custom_call.1} parent=5 // pred_fallthru
        _
      %p2441 = scmp.le.s32.totalorder 2, %s21
      // Predicated region
      $region109: #{tpu_custom_call.1} parent=5 // pred_check
        %p2442 = pneg %p2441
      $region110: #{tpu_custom_call.1} parent=5 // pred_check_branch
        %2444 = sbr.rel (%p2442) target = $region112
      $region111: #{tpu_custom_call.1} parent=5 // pred_region
        %s2445 = ssub.s32 %s21, 2
      $region112: #{tpu_custom_call.1} parent=5 // pred_fallthru
        _
    $region6: #{tpu_custom_call.1} parent=1 // loop_footer
      %s25 = sadd.s32 1, %s21
    $region7: #{tpu_custom_call.1} parent=1 // loop_footer_branch
      %20 = sbr.rel target = $region3
    $region8: #{tpu_custom_call.1} parent=1 // loop_exit
      _
    %2446 = vsyncpa [#allocation5], 1
    %s2447 = scalar_lea.sflag [#allocation5], 1
    %2448 = vsyncpa %s2447, 1
    %2449 = vsyncpa [#allocation8], 1
    %2450 = vsyncpa [#allocation11], 1
    %2451 = vsyncpa [#allocation14], 1
    %2452 = vsyncpa [#allocation6], 1
    %s2453 = scalar_lea.sflag [#allocation6], 1
    %2454 = vsyncpa %s2453, 1

</llo_original>
